<compile_context>
chip_gen: v7x
topology: tpu7x:2x2x1
jax: 0.10.0
libtpu: 0.0.40
codegen_flags: <defaults>
</compile_context>

<pallas_src>
import functools

import jax
import jax.numpy as jnp
from jax import lax
from jax.experimental import pallas as pl
from jax.experimental.pallas import tpu as pltpu

LN_EPS = 1e-5      # nn.LayerNorm default eps
GATE_EPS = 1e-6    # EdgeGatedGraphConv denominator eps
RANK_FACTOR = 4    # EdgeGatedGraphConv default (ALIGNNLayer does not override it)
TILE_E = 256       # edge rows per grid step (tune: v5e ~512, v6e 256-512, v7x <=256)


def _round_up(n, m):
    return (n + m - 1) // m * m


def _vmem_limit_bytes():
    cap = 128 * 1024 * 1024
    try:
        cap = int(pltpu.get_tpu_info().vmem_capacity_bytes)
    except Exception:
        pass
    return int(min(cap * 3 // 4, 100 * 1024 * 1024))


@functools.lru_cache(maxsize=None)
def _buffered_one_supported():
    """Probe whether BlockSpec(pipeline_mode=pl.Buffered(1)) lowers cleanly."""
    if not hasattr(pl, "Buffered"):
        return False
    try:
        spec = pl.BlockSpec((8, 128), lambda i: (0, 0), pipeline_mode=pl.Buffered(1))
    except TypeError:
        return False
    try:
        def _copy(x_ref, o_ref):
            o_ref[...] = x_ref[...]
        probe = pl.pallas_call(
            _copy, out_shape=jax.ShapeDtypeStruct((8, 128), jnp.float32),
            grid=(2,), in_specs=[spec],
            out_specs=pl.BlockSpec((8, 128), lambda i: (0, 0)),
        )(jnp.zeros((8, 128), jnp.float32))
        jax.block_until_ready(probe)
        return True
    except Exception:
        return False


def _resident_spec(shape):
    """Spec for a block whose index never changes across the grid: single-buffer
    it when supported (pure VMEM saving), otherwise default double buffering."""
    if _buffered_one_supported():
        return pl.BlockSpec(shape, lambda i: (0, 0), pipeline_mode=pl.Buffered(1))
    return pl.BlockSpec(shape, lambda i: (0, 0))


# ----------------------------- Pallas kernel --------------------------------
def _egc_kernel(f_real,
                nf_ref, nproj_ref, xupd_ref, ef_ref, idx_ref,
                wedge_ref, bedge_ref, ln_ref,
                x_ref, y_ref,
                acc_ref):
    """One EdgeGatedGraphConv forward, tiled over edge rows (reduction grid).

    nf_ref    : [N_pad, F_pad]   f32  node features (resident; residual)
    nproj_ref : [N_pad, 3*F_pad] bf16 [src_gate | dst_update(Bh) | dst_gate](nf)
    xupd_ref  : [N_pad, F_pad]   f32  src_update(nf)
    ef_ref    : [TILE_E, F_pad]  f32  edge-feature tile
    idx_ref   : [TILE_E, 2]      i32  (src, dst) endpoints of the edge tile
    wedge_ref : [F_pad, F_pad]   bf16 edge_gate weight; bedge_ref [1,F_pad] f32 bias
    ln_ref    : [4, F_pad]       f32  gamma_nodes, beta_nodes, gamma_edges, beta_edges
    acc_ref   : [N_pad, 2*F_pad] f32  [sum(Bh*sigma) | sum(sigma)] accumulator
    """
    t = pl.program_id(0)
    n_pad, f_pad = nf_ref.shape
    tile_e = ef_ref.shape[0]

    @pl.when(t == 0)
    def _init():
        acc_ref[...] = jnp.zeros_like(acc_ref)

    # lane mask: features zero-padded from f_real to f_pad lanes
    lane = lax.broadcasted_iota(jnp.int32, (1, f_pad), 1)
    fmask = (lane < f_real).astype(jnp.float32)
    inv_f = 1.0 / float(f_real)

    def layernorm(v, gamma, beta):
        mu = jnp.sum(v * fmask, axis=-1, keepdims=True) * inv_f
        c = (v - mu) * fmask
        var = jnp.sum(c * c, axis=-1, keepdims=True) * inv_f
        return c * lax.rsqrt(var + LN_EPS) * gamma + beta

    def silu(v):
        return v * jax.nn.sigmoid(v)

    ef = ef_ref[...]                          # [tile_e, f_pad] f32
    s_col = idx_ref[:, 0:1]                   # [tile_e, 1] int32
    d_col = idx_ref[:, 1:2]                   # [tile_e, 1] int32

    # One-hot gather/scatter operands built in-register (bf16: 0/1 exact).
    # Padded edges carry index == n_pad (out of range) -> all-zero rows, so
    # they contribute nothing to either gather or the scatter-add.
    iota_en = lax.broadcasted_iota(jnp.int32, (tile_e, n_pad), 1)
    src_oh = (iota_en == s_col).astype(jnp.bfloat16)      # [tile_e, n_pad]
    dst_oh = (iota_en == d_col).astype(jnp.bfloat16)      # [tile_e, n_pad]

    # src-side gather: ONE MXU push yields [e_src | Bh] on edges.
    gsrc = jnp.dot(src_oh, nproj_ref[:, 0:2 * f_pad],
                   preferred_element_type=jnp.float32)    # [tile_e, 2*f_pad]
    e_src = gsrc[:, 0:f_pad]
    bh_e = gsrc[:, f_pad:2 * f_pad]
    # dst-side gather: e_dst on edges (single f_pad-wide push).
    e_dst = jnp.dot(dst_oh, nproj_ref[:, 2 * f_pad:3 * f_pad],
                    preferred_element_type=jnp.float32)

    e_edge = (jnp.dot(ef.astype(jnp.bfloat16), wedge_ref[...],
                      preferred_element_type=jnp.float32) + bedge_ref[...])
    m = e_src + e_dst + e_edge
    sigma = jax.nn.sigmoid(m)

    # Fused scatter-add to destination nodes: one MXU push contracting over the
    # edge axis of dst_oh accumulates [sum(Bh*sigma) | sum(sigma)] together
    # (no transposed one-hot needed).
    rhs = jnp.concatenate([bh_e * sigma, sigma], axis=-1).astype(jnp.bfloat16)
    acc_ref[...] += lax.dot_general(dst_oh, rhs, (((0,), (0,)), ((), ())),
                                    preferred_element_type=jnp.float32)

    # edge-side output: y = ef + SiLU(LN(m))
    y = silu(layernorm(m, ln_ref[2:3, :], ln_ref[3:4, :]))
    y_ref[...] = (ef + y).astype(y_ref.dtype)

    # ---- last tile: gated-aggregation finalize + node-side output ----------
    @pl.when(t == pl.num_programs(0) - 1)
    def _finalize():
        num = acc_ref[:, 0:f_pad]
        den = acc_ref[:, f_pad:2 * f_pad]
        h = num / (den + GATE_EPS)            # exact division; padded rows -> 0
        x = silu(layernorm(xupd_ref[...] + h, ln_ref[0:1, :], ln_ref[1:2, :]))
        x_ref[...] = (nf_ref[...] + x).astype(x_ref.dtype)


# ------------------------------ wrapper --------------------------------------
def egc_pallas(node_feats, edge_feats, src, dst, fused, *, f_real, tile_e=TILE_E):
    n, f = node_feats.shape
    e = edge_feats.shape[0]
    f_pad = fused["f_pad"]
    assert f == f_real and f_real <= f_pad
    n_pad = _round_up(max(n, 8), 8)
    e_pad = _round_up(max(e, tile_e), tile_e)

    nf = jnp.zeros((n_pad, f_pad), jnp.float32).at[:n, :f].set(node_feats)
    ef = jnp.zeros((e_pad, f_pad), jnp.float32).at[:e, :f].set(edge_feats)
    # padded edges get an out-of-range index (n_pad) -> masked automatically
    idx = jnp.full((e_pad, 2), n_pad, jnp.int32)
    idx = idx.at[:e, 0].set(src.astype(jnp.int32)).at[:e, 1].set(dst.astype(jnp.int32))

    # Fused node-side projections hoisted out of the kernel (plain XLA matmul).
    # Column layout: [src_gate | dst_update(Bh) | dst_gate | src_update].
    nproj = nf @ fused["w_node"] + fused["b_node"]
    nproj_g = nproj[:, :3 * f_pad].astype(jnp.bfloat16)   # gather operand (bf16 MXU)
    x_upd = nproj[:, 3 * f_pad:]                          # src_update(nf), f32

    grid = (e_pad // tile_e,)
    kernel = functools.partial(_egc_kernel, f_real)

    flops = 2 * (e_pad * f_pad * f_pad           # edge gate
                 + 5 * e_pad * n_pad * f_pad)    # gather (3F) + scatter (2F)
    cost = pl.CostEstimate(
        flops=int(flops),
        transcendentals=int(4 * e_pad * f_pad + 2 * n_pad * f_pad),
        bytes_accessed=int(4 * (nf.size + x_upd.size + 2 * ef.size + n_pad * f_pad
                                + idx.size)
                           + 2 * (nproj_g.size + fused["w_edge"].size)))

    x_out, y_out = pl.pallas_call(
        kernel,
        out_shape=(jax.ShapeDtypeStruct((n_pad, f_pad), jnp.float32),
                   jax.ShapeDtypeStruct((e_pad, f_pad), jnp.float32)),
        grid=grid,
        in_specs=[
            _resident_spec((n_pad, f_pad)),                    # node feats (residual)
            _resident_spec((n_pad, 3 * f_pad)),                # fused projections (bf16)
            _resident_spec((n_pad, f_pad)),                    # src_update(nf)
            pl.BlockSpec((tile_e, f_pad), lambda i: (i, 0)),   # edge-feature tile
            pl.BlockSpec((tile_e, 2), lambda i: (i, 0)),       # packed (src,dst) indices
            _resident_spec((f_pad, f_pad)),                    # edge_gate weight (bf16)
            _resident_spec((1, f_pad)),                        # edge_gate bias
            _resident_spec((4, f_pad)),                        # LayerNorm gamma/beta
        ],
        out_specs=(pl.BlockSpec((n_pad, f_pad), lambda i: (0, 0)),
                   pl.BlockSpec((tile_e, f_pad), lambda i: (i, 0))),
        scratch_shapes=[pltpu.VMEM((n_pad, 2 * f_pad), jnp.float32)],  # [num | den]
        compiler_params=pltpu.CompilerParams(
            # edge axis carries the scatter accumulator -> must be sequential
            dimension_semantics=("arbitrary",),
            vmem_limit_bytes=_vmem_limit_bytes()),
        cost_estimate=cost,
    )(nf, nproj_g, x_upd, ef, idx,
      fused["w_edge"], fused["b_edge"], fused["ln"])

    return x_out[:n, :f], y_out[:e, :f]


# ------------------------------ ALIGNN layer ---------------------------------
def alignn_layer(x, y, z, g_src, g_dst, lg_src, lg_dst, edge_fused, atom_fused,
                 *, f_real, tile_e=TILE_E):
    # edge_update on the line graph lg: nodes = edges of g (y), edges = triplets (z)
    y, z = egc_pallas(y, z, lg_src, lg_dst, edge_fused, f_real=f_real, tile_e=tile_e)
    # atom_update on g: nodes = atoms (x), edges = updated y
    x, y = egc_pallas(x, y, g_src, g_dst, atom_fused, f_real=f_real, tile_e=tile_e)
    return x, y, z


# --------------------------- parameter construction --------------------------
def init_egc_params(key, feature_dims, rank_factor=RANK_FACTOR):
    rank = feature_dims // rank_factor
    kA, kB, kb = jax.random.split(key, 3)
    A = jax.random.normal(kA, (5, feature_dims, rank), jnp.float32) / jnp.sqrt(feature_dims)
    B = jax.random.normal(kB, (5, rank, feature_dims), jnp.float32) / jnp.sqrt(rank)
    b = jax.random.normal(kb, (5, feature_dims), jnp.float32) * 0.01
    ln = jnp.stack([jnp.ones(feature_dims), jnp.zeros(feature_dims),
                    jnp.ones(feature_dims), jnp.zeros(feature_dims)]).astype(jnp.float32)
    return {"A": A, "B": B, "b": b, "ln": ln}


def fuse_and_pad_params(p, f_real):
    """Fold low-rank pairs (W = A @ B), fuse node-side linears in the gather
    column order [src_gate | dst_update | dst_gate | src_update], zero-pad lanes."""
    f_pad = _round_up(max(f_real, 128), 128)

    def w(i):
        return jnp.zeros((f_pad, f_pad), jnp.float32).at[:f_real, :f_real].set(
            p["A"][i] @ p["B"][i])

    def bias(i):
        return jnp.zeros((f_pad,), jnp.float32).at[:f_real].set(p["b"][i])

    order = (0, 4, 1, 3)     # src_gate, dst_update(Bh), dst_gate, src_update
    w_node = jnp.concatenate([w(i) for i in order], axis=1)
    b_node = jnp.concatenate([bias(i) for i in order])[None, :]
    ln = jnp.zeros((4, f_pad), jnp.float32).at[:, :f_real].set(p["ln"])
    return {"w_node": w_node, "b_node": b_node,
            "w_edge": w(2).astype(jnp.bfloat16), "b_edge": bias(2)[None, :],
            "ln": ln, "f_pad": f_pad}


# ------------------------------ pure-JAX reference ---------------------------
def egc_ref(node_feats, edge_feats, src, dst, p):
    def lr(v, i):
        return (v @ p["A"][i]) @ p["B"][i] + p["b"][i]

    e_src, e_dst, e_edge = lr(node_feats, 0), lr(node_feats, 1), lr(edge_feats, 2)
    m = e_src[src] + e_dst[dst] + e_edge
    sigma = jax.nn.sigmoid(m)
    Bh = lr(node_feats, 4)
    num = jnp.zeros_like(node_feats).at[dst].add(Bh[src] * sigma)
    den = jnp.zeros_like(node_feats).at[dst].add(sigma)
    h = num / (den + GATE_EPS)

    def ln(v, g, b_):
        mu = v.mean(-1, keepdims=True)
        var = ((v - mu) ** 2).mean(-1, keepdims=True)
        return (v - mu) / jnp.sqrt(var + LN_EPS) * g + b_

    xo = lr(node_feats, 3) + h
    xo = ln(xo, p["ln"][0], p["ln"][1])
    xo = jax.nn.silu(xo)
    xo = node_feats + xo
    yo = ln(m, p["ln"][2], p["ln"][3])
    yo = jax.nn.silu(yo)
    yo = edge_feats + yo
    return xo, yo


def alignn_ref(x, y, z, g_src, g_dst, lg_src, lg_dst, edge_params, atom_params):
    y, z = egc_ref(y, z, lg_src, lg_dst, edge_params)
    x, y = egc_ref(x, y, g_src, g_dst, atom_params)
    return x, y, z


# ----------------------------------- main -------------------------------------
if __name__ == "__main__":
    key = jax.random.PRNGKey(0)
    F = 32            # feature_dims (divisible by rank_factor=4 -> low-rank path)
    n_atoms = 8       # nodes of g
    n_edges = 16      # edges of g == nodes of the line graph lg
    n_triplets = 24   # edges of lg
    tile_e = 8        # tiny edge tile so the demo exercises the multi-tile reduction

    keys = jax.random.split(key, 10)
    x = jax.random.normal(keys[0], (n_atoms, F), jnp.float32)
    y = jax.random.normal(keys[1], (n_edges, F), jnp.float32)
    z = jax.random.normal(keys[2], (n_triplets, F), jnp.float32)

    g_src = jax.random.randint(keys[3], (n_edges,), 0, n_atoms)
    g_dst = jax.random.randint(keys[4], (n_edges,), 0, n_atoms)
    lg_src = jax.random.randint(keys[5], (n_triplets,), 0, n_edges)
    lg_dst = jax.random.randint(keys[6], (n_triplets,), 0, n_edges)

    edge_params = init_egc_params(keys[7], F)   # self.edge_update
    atom_params = init_egc_params(keys[8], F)   # self.atom_update
    edge_fused = fuse_and_pad_params(edge_params, F)
    atom_fused = fuse_and_pad_params(atom_params, F)

    x_out, y_out, z_out = alignn_layer(x, y, z, g_src, g_dst, lg_src, lg_dst,
                                       edge_fused, atom_fused, f_real=F,
                                       tile_e=tile_e)
    jax.block_until_ready((x_out, y_out, z_out))

    x_r, y_r, z_r = alignn_ref(x, y, z, g_src, g_dst, lg_src, lg_dst,
                               edge_params, atom_params)
    # bf16 MXU operands on the gather/scatter path (f32 accumulation) give a
    # slightly looser parity than an all-f32 kernel.
    tol = dict(atol=3e-2, rtol=3e-2)
    ok = (jnp.allclose(x_out, x_r, **tol)
          and jnp.allclose(y_out, y_r, **tol)
          and jnp.allclose(z_out, z_r, **tol))
    assert ok, "Pallas ALIGNNLayer output does not match reference"
    print("KERNEL_OK")
</pallas_src>

<mosaic_0001>
module attributes {stable_mosaic.version = 11 : i64} {
  func.func @_copy(%arg0: i32, %arg1: memref<8x128xf32, #tpu.memory_space<vmem>>, %arg2: memref<8x128xf32, #tpu.memory_space<vmem>>) attributes {dimension_semantics = [#tpu.dimension_semantics<arbitrary>], iteration_bounds = array<i64: 2>, scalar_prefetch = 0 : i64, scratch_operands = 0 : i64, tpu.core_type = #tpu.core_type<tc>, window_params = [{pipeline_mode = #tpu.pipeline_mode<synchronous>, transform_indices = @transform_0, window_bounds = array<i64: 8, 128>}, {pipeline_mode = #tpu.pipeline_mode<synchronous>, transform_indices = @transform_1, window_bounds = array<i64: 8, 128>}]} {
    %c0 = arith.constant 0 : index
    %c0_0 = arith.constant 0 : index
    %0 = vector.load %arg1[%c0, %c0_0] : memref<8x128xf32, #tpu.memory_space<vmem>>, vector<8x128xf32>
    %c0_1 = arith.constant 0 : index
    %c0_2 = arith.constant 0 : index
    %1 = vector.load %arg2[%c0_1, %c0_2] : memref<8x128xf32, #tpu.memory_space<vmem>>, vector<8x128xf32>
    tpu.vector_store %arg2[%c0_1, %c0_2], %0 {strides = array<i32>} : memref<8x128xf32, #tpu.memory_space<vmem>>, vector<8x128xf32>,
    return
  }
  func.func @transform_0(%arg0: i32) -> (i32, i32) {
    %c0_i32 = arith.constant 0 : i32
    %c0_i32_0 = arith.constant 0 : i32
    %c0_i32_1 = arith.constant 0 : i32
    return %c0_i32, %c0_i32_0 : i32, i32
  }
  func.func @transform_1(%arg0: i32) -> (i32, i32) {
    %c0_i32 = arith.constant 0 : i32
    %c0_i32_0 = arith.constant 0 : i32
    %c0_i32_1 = arith.constant 0 : i32
    return %c0_i32, %c0_i32_0 : i32, i32
  }
}

module attributes {stable_mosaic.version = 11 : i64} {
  func.func @_egc_kernel(%arg0: i32, %arg1: memref<16x128xf32, #tpu.memory_space<vmem>>, %arg2: memref<16x384xbf16, #tpu.memory_space<vmem>>, %arg3: memref<16x128xf32, #tpu.memory_space<vmem>>, %arg4: memref<8x128xf32, #tpu.memory_space<vmem>>, %arg5: memref<8x2xi32, #tpu.memory_space<vmem>>, %arg6: memref<128x128xbf16, #tpu.memory_space<vmem>>, %arg7: memref<1x128xf32, #tpu.memory_space<vmem>>, %arg8: memref<4x128xf32, #tpu.memory_space<vmem>>, %arg9: memref<16x128xf32, #tpu.memory_space<vmem>>, %arg10: memref<8x128xf32, #tpu.memory_space<vmem>>, %arg11: memref<16x256xf32, #tpu.memory_space<vmem>>) attributes {dimension_semantics = [#tpu.dimension_semantics<arbitrary>], iteration_bounds = array<i64: 3>, scalar_prefetch = 0 : i64, scratch_operands = 1 : i64, tpu.core_type = #tpu.core_type<tc>, window_params = [{pipeline_mode = #tpu.pipeline_mode<synchronous>, transform_indices = @transform_0, window_bounds = array<i64: 16, 128>}, {pipeline_mode = #tpu.pipeline_mode<synchronous>, transform_indices = @transform_1, window_bounds = array<i64: 16, 384>}, {pipeline_mode = #tpu.pipeline_mode<synchronous>, transform_indices = @transform_2, window_bounds = array<i64: 16, 128>}, {transform_indices = @transform_3, window_bounds = array<i64: 8, 128>}, {transform_indices = @transform_4, window_bounds = array<i64: 8, 2>}, {pipeline_mode = #tpu.pipeline_mode<synchronous>, transform_indices = @transform_5, window_bounds = array<i64: 128, 128>}, {pipeline_mode = #tpu.pipeline_mode<synchronous>, transform_indices = @transform_6, window_bounds = array<i64: 1, 128>}, {pipeline_mode = #tpu.pipeline_mode<synchronous>, transform_indices = @transform_7, window_bounds = array<i64: 4, 128>}, {pipeline_mode = #tpu.pipeline_mode<synchronous>, transform_indices = @transform_8, window_bounds = array<i64: 16, 128>}, {transform_indices = @transform_9, window_bounds = array<i64: 8, 128>}]} {
    %c0_i32 = arith.constant 0 : i32
    %0 = arith.cmpi eq, %arg0, %c0_i32 : i32
    %1 = arith.extui %0 : i1 to i32
    %c0_i32_0 = arith.constant 0 : i32
    %2 = arith.cmpi ne, %1, %c0_i32_0 : i32
    scf.if %2 {
      %cst_31 = arith.constant 0.000000e+00 : f32
      %85 = vector.broadcast %cst_31 : f32 to vector<16x256xf32>
      %c0_32 = arith.constant 0 : index
      %c0_33 = arith.constant 0 : index
      %86 = vector.load %arg11[%c0_32, %c0_33] : memref<16x256xf32, #tpu.memory_space<vmem>>, vector<16x256xf32>
      tpu.vector_store %arg11[%c0_32, %c0_33], %85 {strides = array<i32>} : memref<16x256xf32, #tpu.memory_space<vmem>>, vector<16x256xf32>,
    } else {
    }
    %3 = tpu.iota {dimensions = array<i32: 1>} : vector<1x128xi32>
    %c32_i32 = arith.constant 32 : i32
    %4 = vector.broadcast %c32_i32 : i32 to vector<1x128xi32>
    %5 = arith.cmpi slt, %3, %4 : vector<1x128xi32>
    %6 = arith.extui %5 : vector<1x128xi1> to vector<1x128xi32>
    %7 = arith.sitofp %6 : vector<1x128xi32> to vector<1x128xf32>
    %c0 = arith.constant 0 : index
    %c0_1 = arith.constant 0 : index
    %8 = vector.load %arg4[%c0, %c0_1] : memref<8x128xf32, #tpu.memory_space<vmem>>, vector<8x128xf32>
    %c0_2 = arith.constant 0 : index
    %c0_3 = arith.constant 0 : index
    %9 = vector.load %arg5[%c0_2, %c0_3] : memref<8x2xi32, #tpu.memory_space<vmem>>, vector<8x1xi32>
    %c0_4 = arith.constant 0 : index
    %c1 = arith.constant 1 : index
    %10 = vector.load %arg5[%c0_4, %c1] : memref<8x2xi32, #tpu.memory_space<vmem>>, vector<8x1xi32>
    %11 = tpu.iota {dimensions = array<i32: 1>} : vector<8x16xi32>
    %12 = vector.broadcast %9 : vector<8x1xi32> to vector<8x16xi32>
    %13 = arith.cmpi eq, %11, %12 : vector<8x16xi32>
    %14 = arith.extui %13 : vector<8x16xi1> to vector<8x16xi32>
    %15 = arith.sitofp %14 : vector<8x16xi32> to vector<8x16xf32>
    %16 = arith.truncf %15 : vector<8x16xf32> to vector<8x16xbf16>
    %17 = vector.broadcast %10 : vector<8x1xi32> to vector<8x16xi32>
    %18 = arith.cmpi eq, %11, %17 : vector<8x16xi32>
    %19 = arith.extui %18 : vector<8x16xi1> to vector<8x16xi32>
    %20 = arith.sitofp %19 : vector<8x16xi32> to vector<8x16xf32>
    %21 = arith.truncf %20 : vector<8x16xf32> to vector<8x16xbf16>
    %c0_5 = arith.constant 0 : index
    %c0_6 = arith.constant 0 : index
    %22 = vector.load %arg2[%c0_5, %c0_6] : memref<16x384xbf16, #tpu.memory_space<vmem>>, vector<16x256xbf16>
    %cst = arith.constant dense<0.000000e+00> : vector<8x256xf32>
    %23 = tpu.matmul %16, %22, %cst {dimension_numbers = #tpu.dot_dimension_numbers<[1], [0], [0], [1], [0, 0, 1, 1], [], []>} : vector<8x16xbf16>, vector<16x256xbf16>, vector<8x256xf32> -> vector<8x256xf32>
    %24 = vector.extract_strided_slice %23 {offsets = [0, 0], sizes = [8, 128], strides = [1, 1]} : vector<8x256xf32> to vector<8x128xf32>
    %25 = vector.extract_strided_slice %23 {offsets = [0, 128], sizes = [8, 128], strides = [1, 1]} : vector<8x256xf32> to vector<8x128xf32>
    %c0_7 = arith.constant 0 : index
    %c256 = arith.constant 256 : index
    %26 = vector.load %arg2[%c0_7, %c256] : memref<16x384xbf16, #tpu.memory_space<vmem>>, vector<16x128xbf16>
    %cst_8 = arith.constant dense<0.000000e+00> : vector<8x128xf32>
    %27 = tpu.matmul %21, %26, %cst_8 {dimension_numbers = #tpu.dot_dimension_numbers<[1], [0], [0], [1], [0, 0, 1, 1], [], []>} : vector<8x16xbf16>, vector<16x128xbf16>, vector<8x128xf32> -> vector<8x128xf32>
    %28 = arith.truncf %8 : vector<8x128xf32> to vector<8x128xbf16>
    %c0_9 = arith.constant 0 : index
    %c0_10 = arith.constant 0 : index
    %29 = vector.load %arg6[%c0_9, %c0_10] : memref<128x128xbf16, #tpu.memory_space<vmem>>, vector<128x128xbf16>
    %cst_11 = arith.constant dense<0.000000e+00> : vector<8x128xf32>
    %30 = tpu.matmul %28, %29, %cst_11 {dimension_numbers = #tpu.dot_dimension_numbers<[1], [0], [0], [1], [0, 0, 1, 1], [], []>} : vector<8x128xbf16>, vector<128x128xbf16>, vector<8x128xf32> -> vector<8x128xf32>
    %c0_12 = arith.constant 0 : index
    %c0_13 = arith.constant 0 : index
    %31 = vector.load %arg7[%c0_12, %c0_13] : memref<1x128xf32, #tpu.memory_space<vmem>>, vector<1x128xf32>
    %32 = vector.broadcast %31 : vector<1x128xf32> to vector<8x128xf32>
    %33 = arith.addf %30, %32 : vector<8x128xf32>
    %34 = arith.addf %24, %27 : vector<8x128xf32>
    %35 = arith.addf %34, %33 : vector<8x128xf32>
    %36 = arith.negf %35 : vector<8x128xf32>
    %37 = math.exp %36 : vector<8x128xf32>
    %cst_14 = arith.constant 1.000000e+00 : f32
    %38 = vector.broadcast %cst_14 : f32 to vector<8x128xf32>
    %39 = arith.addf %38, %37 : vector<8x128xf32>
    %40 = arith.divf %38, %39 : vector<8x128xf32>
    %41 = arith.mulf %25, %40 : vector<8x128xf32>
    %42 = tpu.concatenate %41, %40 in 1 : vector<8x128xf32>, vector<8x128xf32> -> vector<8x256xf32>
    %43 = arith.truncf %42 : vector<8x256xf32> to vector<8x256xbf16>
    %c0_15 = arith.constant 0 : index
    %c0_16 = arith.constant 0 : index
    %44 = vector.load %arg11[%c0_15, %c0_16] : memref<16x256xf32, #tpu.memory_space<vmem>>, vector<16x256xf32>
    %cst_17 = arith.constant dense<0.000000e+00> : vector<16x256xf32>
    %45 = tpu.matmul %21, %43, %cst_17 {dimension_numbers = #tpu.dot_dimension_numbers<[0], [0], [1], [1], [0, 1, 1, 1], [], []>} : vector<8x16xbf16>, vector<8x256xbf16>, vector<16x256xf32> -> vector<16x256xf32>
    %46 = arith.addf %44, %45 : vector<16x256xf32>
    %c0_18 = arith.constant 0 : index
    %c0_19 = arith.constant 0 : index
    %47 = vector.load %arg11[%c0_18, %c0_19] : memref<16x256xf32, #tpu.memory_space<vmem>>, vector<16x256xf32>
    tpu.vector_store %arg11[%c0_18, %c0_19], %46 {strides = array<i32>} : memref<16x256xf32, #tpu.memory_space<vmem>>, vector<16x256xf32>,
    %c2 = arith.constant 2 : index
    %c0_20 = arith.constant 0 : index
    %48 = vector.load %arg8[%c2, %c0_20] : memref<4x128xf32, #tpu.memory_space<vmem>>, vector<1x128xf32>
    %c3 = arith.constant 3 : index
    %c0_21 = arith.constant 0 : index
    %49 = vector.load %arg8[%c3, %c0_21] : memref<4x128xf32, #tpu.memory_space<vmem>>, vector<1x128xf32>
    %50 = vector.broadcast %7 : vector<1x128xf32> to vector<8x128xf32>
    %51 = arith.mulf %35, %50 : vector<8x128xf32>
    %cst_22 = arith.constant dense<0.000000e+00> : vector<8xf32>
    %52 = vector.multi_reduction <add>, %51, %cst_22 [1] : vector<8x128xf32> to vector<8xf32>
    %53 = vector.shape_cast %52 : vector<8xf32> to vector<8x1xf32>
    %cst_23 = arith.constant 3.125000e-02 : f32
    %54 = vector.broadcast %cst_23 : f32 to vector<8x1xf32>
    %55 = arith.mulf %53, %54 : vector<8x1xf32>
    %56 = vector.broadcast %55 : vector<8x1xf32> to vector<8x128xf32>
    %57 = arith.subf %35, %56 : vector<8x128xf32>
    %58 = vector.broadcast %7 : vector<1x128xf32> to vector<8x128xf32>
    %59 = arith.mulf %57, %58 : vector<8x128xf32>
    %60 = arith.mulf %59, %59 : vector<8x128xf32>
    %cst_24 = arith.constant dense<0.000000e+00> : vector<8xf32>
    %61 = vector.multi_reduction <add>, %60, %cst_24 [1] : vector<8x128xf32> to vector<8xf32>
    %62 = vector.shape_cast %61 : vector<8xf32> to vector<8x1xf32>
    %cst_25 = arith.constant 3.125000e-02 : f32
    %63 = vector.broadcast %cst_25 : f32 to vector<8x1xf32>
    %64 = arith.mulf %62, %63 : vector<8x1xf32>
    %cst_26 = arith.constant 9.99999974E-6 : f32
    %65 = vector.broadcast %cst_26 : f32 to vector<8x1xf32>
    %66 = arith.addf %64, %65 : vector<8x1xf32>
    %67 = math.rsqrt %66 : vector<8x1xf32>
    %68 = vector.broadcast %67 : vector<8x1xf32> to vector<8x128xf32>
    %69 = arith.mulf %59, %68 : vector<8x128xf32>
    %70 = vector.broadcast %48 : vector<1x128xf32> to vector<8x128xf32>
    %71 = arith.mulf %69, %70 : vector<8x128xf32>
    %72 = vector.broadcast %49 : vector<1x128xf32> to vector<8x128xf32>
    %73 = arith.addf %71, %72 : vector<8x128xf32>
    %74 = arith.negf %73 : vector<8x128xf32>
    %75 = math.exp %74 : vector<8x128xf32>
    %cst_27 = arith.constant 1.000000e+00 : f32
    %76 = vector.broadcast %cst_27 : f32 to vector<8x128xf32>
    %77 = arith.addf %76, %75 : vector<8x128xf32>
    %78 = arith.divf %76, %77 : vector<8x128xf32>
    %79 = arith.mulf %73, %78 : vector<8x128xf32>
    %80 = arith.addf %8, %79 : vector<8x128xf32>
    %c0_28 = arith.constant 0 : index
    %c0_29 = arith.constant 0 : index
    %81 = vector.load %arg10[%c0_28, %c0_29] : memref<8x128xf32, #tpu.memory_space<vmem>>, vector<8x128xf32>
    tpu.vector_store %arg10[%c0_28, %c0_29], %80 {strides = array<i32>} : memref<8x128xf32, #tpu.memory_space<vmem>>, vector<8x128xf32>,
    %c2_i32 = arith.constant 2 : i32
    %82 = arith.cmpi eq, %arg0, %c2_i32 : i32
    %83 = arith.extui %82 : i1 to i32
    %c0_i32_30 = arith.constant 0 : i32
    %84 = arith.cmpi ne, %83, %c0_i32_30 : i32
    scf.if %84 {
      %c0_31 = arith.constant 0 : index
      %c0_32 = arith.constant 0 : index
      %85 = vector.load %arg11[%c0_31, %c0_32] : memref<16x256xf32, #tpu.memory_space<vmem>>, vector<16x128xf32>
      %c0_33 = arith.constant 0 : index
      %c128 = arith.constant 128 : index
      %86 = vector.load %arg11[%c0_33, %c128] : memref<16x256xf32, #tpu.memory_space<vmem>>, vector<16x128xf32>
      %cst_34 = arith.constant 9.99999997E-7 : f32
      %87 = vector.broadcast %cst_34 : f32 to vector<16x128xf32>
      %88 = arith.addf %86, %87 : vector<16x128xf32>
      %89 = arith.divf %85, %88 : vector<16x128xf32>
      %c0_35 = arith.constant 0 : index
      %c0_36 = arith.constant 0 : index
      %90 = vector.load %arg3[%c0_35, %c0_36] : memref<16x128xf32, #tpu.memory_space<vmem>>, vector<16x128xf32>
      %91 = arith.addf %90, %89 : vector<16x128xf32>
      %c0_37 = arith.constant 0 : index
      %c0_38 = arith.constant 0 : index
      %92 = vector.load %arg8[%c0_37, %c0_38] : memref<4x128xf32, #tpu.memory_space<vmem>>, vector<1x128xf32>
      %c1_39 = arith.constant 1 : index
      %c0_40 = arith.constant 0 : index
      %93 = vector.load %arg8[%c1_39, %c0_40] : memref<4x128xf32, #tpu.memory_space<vmem>>, vector<1x128xf32>
      %94 = vector.broadcast %7 : vector<1x128xf32> to vector<16x128xf32>
      %95 = arith.mulf %91, %94 : vector<16x128xf32>
      %cst_41 = arith.constant dense<0.000000e+00> : vector<16xf32>
      %96 = vector.multi_reduction <add>, %95, %cst_41 [1] : vector<16x128xf32> to vector<16xf32>
      %97 = vector.shape_cast %96 : vector<16xf32> to vector<16x1xf32>
      %cst_42 = arith.constant 3.125000e-02 : f32
      %98 = vector.broadcast %cst_42 : f32 to vector<16x1xf32>
      %99 = arith.mulf %97, %98 : vector<16x1xf32>
      %100 = vector.broadcast %99 : vector<16x1xf32> to vector<16x128xf32>
      %101 = arith.subf %91, %100 : vector<16x128xf32>
      %102 = vector.broadcast %7 : vector<1x128xf32> to vector<16x128xf32>
      %103 = arith.mulf %101, %102 : vector<16x128xf32>
      %104 = arith.mulf %103, %103 : vector<16x128xf32>
      %cst_43 = arith.constant dense<0.000000e+00> : vector<16xf32>
      %105 = vector.multi_reduction <add>, %104, %cst_43 [1] : vector<16x128xf32> to vector<16xf32>
      %106 = vector.shape_cast %105 : vector<16xf32> to vector<16x1xf32>
      %cst_44 = arith.constant 3.125000e-02 : f32
      %107 = vector.broadcast %cst_44 : f32 to vector<16x1xf32>
      %108 = arith.mulf %106, %107 : vector<16x1xf32>
      %cst_45 = arith.constant 9.99999974E-6 : f32
      %109 = vector.broadcast %cst_45 : f32 to vector<16x1xf32>
      %110 = arith.addf %108, %109 : vector<16x1xf32>
      %111 = math.rsqrt %110 : vector<16x1xf32>
      %112 = vector.broadcast %111 : vector<16x1xf32> to vector<16x128xf32>
      %113 = arith.mulf %103, %112 : vector<16x128xf32>
      %114 = vector.broadcast %92 : vector<1x128xf32> to vector<16x128xf32>
      %115 = arith.mulf %113, %114 : vector<16x128xf32>
      %116 = vector.broadcast %93 : vector<1x128xf32> to vector<16x128xf32>
      %117 = arith.addf %115, %116 : vector<16x128xf32>
      %118 = arith.negf %117 : vector<16x128xf32>
      %119 = math.exp %118 : vector<16x128xf32>
      %cst_46 = arith.constant 1.000000e+00 : f32
      %120 = vector.broadcast %cst_46 : f32 to vector<16x128xf32>
      %121 = arith.addf %120, %119 : vector<16x128xf32>
      %122 = arith.divf %120, %121 : vector<16x128xf32>
      %123 = arith.mulf %117, %122 : vector<16x128xf32>
      %c0_47 = arith.constant 0 : index
      %c0_48 = arith.constant 0 : index
      %124 = vector.load %arg1[%c0_47, %c0_48] : memref<16x128xf32, #tpu.memory_space<vmem>>, vector<16x128xf32>
      %125 = arith.addf %124, %123 : vector<16x128xf32>
      %c0_49 = arith.constant 0 : index
      %c0_50 = arith.constant 0 : index
      %126 = vector.load %arg9[%c0_49, %c0_50] : memref<16x128xf32, #tpu.memory_space<vmem>>, vector<16x128xf32>
      tpu.vector_store %arg9[%c0_49, %c0_50], %125 {strides = array<i32>} : memref<16x128xf32, #tpu.memory_space<vmem>>, vector<16x128xf32>,
    } else {
    }
    return
  }
  func.func @transform_0(%arg0: i32) -> (i32, i32) {
    %c0_i32 = arith.constant 0 : i32
    %c0_i32_0 = arith.constant 0 : i32
    %c0_i32_1 = arith.constant 0 : i32
    return %c0_i32, %c0_i32_0 : i32, i32
  }
  func.func @transform_1(%arg0: i32) -> (i32, i32) {
    %c0_i32 = arith.constant 0 : i32
    %c0_i32_0 = arith.constant 0 : i32
    %c0_i32_1 = arith.constant 0 : i32
    return %c0_i32, %c0_i32_0 : i32, i32
  }
  func.func @transform_2(%arg0: i32) -> (i32, i32) {
    %c0_i32 = arith.constant 0 : i32
    %c0_i32_0 = arith.constant 0 : i32
    %c0_i32_1 = arith.constant 0 : i32
    return %c0_i32, %c0_i32_0 : i32, i32
  }
  func.func @transform_3(%arg0: i32) -> (i32, i32) {
    %c0_i32 = arith.constant 0 : i32
    %c0_i32_0 = arith.constant 0 : i32
    return %arg0, %c0_i32 : i32, i32
  }
  func.func @transform_4(%arg0: i32) -> (i32, i32) {
    %c0_i32 = arith.constant 0 : i32
    %c0_i32_0 = arith.constant 0 : i32
    return %arg0, %c0_i32 : i32, i32
  }
  func.func @transform_5(%arg0: i32) -> (i32, i32) {
    %c0_i32 = arith.constant 0 : i32
    %c0_i32_0 = arith.constant 0 : i32
    %c0_i32_1 = arith.constant 0 : i32
    return %c0_i32, %c0_i32_0 : i32, i32
  }
  func.func @transform_6(%arg0: i32) -> (i32, i32) {
    %c0_i32 = arith.constant 0 : i32
    %c0_i32_0 = arith.constant 0 : i32
    %c0_i32_1 = arith.constant 0 : i32
    return %c0_i32, %c0_i32_0 : i32, i32
  }
  func.func @transform_7(%arg0: i32) -> (i32, i32) {
    %c0_i32 = arith.constant 0 : i32
    %c0_i32_0 = arith.constant 0 : i32
    %c0_i32_1 = arith.constant 0 : i32
    return %c0_i32, %c0_i32_0 : i32, i32
  }
  func.func @transform_8(%arg0: i32) -> (i32, i32) {
    %c0_i32 = arith.constant 0 : i32
    %c0_i32_0 = arith.constant 0 : i32
    %c0_i32_1 = arith.constant 0 : i32
    return %c0_i32, %c0_i32_0 : i32, i32
  }
  func.func @transform_9(%arg0: i32) -> (i32, i32) {
    %c0_i32 = arith.constant 0 : i32
    %c0_i32_0 = arith.constant 0 : i32
    return %arg0, %c0_i32 : i32, i32
  }
}

</mosaic_0001>

<llo_original>
// kernel: tpu_custom_call.1
$region0: #{tpu_custom_call.1}
  #allocation0 [shape = 'u32[]', space=smem, size = 0x4, offset = 0x4, fixed_abs, tag = 'smem constant byte address 0x4 - core index']
  #allocation1 [shape = 'u32[144,128]{1,0:T(1,128)}', space=vmem, size = 0x12000, scoped, tag = 'internal scratch']
  %s0 = inlined_call_operand.hbm [shape: f32[8,128], index: 0, kind: input, shape index: {}]
  %s1 = inlined_call_operand.hbm [shape: f32[8,128], index: 1, kind: output, shape index: {}]
  %s2 = sld [smem:[#allocation0]]
  $region41: #{tpu_custom_call.1} parent=0
    _
  %s4 = ssub.s32 1, %s2
  %s5 = scalar_select 0, %s4, %s2
  $region1: #{tpu_custom_call.1} parent=0
    #allocation2 [shape = 'u8[4096]{0}', space=vmem, size = 0x1000, scoped, tag = 'input window, operand 0, single buffered']
    #allocation3 [shape = 's32[2]{0}', space=sflag, size = 0x8, scoped, tag = 'scoped memory for tpu_custom_call.1']
    #allocation4 [shape = 's32[2]{0}', space=sflag, size = 0x8, scoped, tag = 'scoped memory for tpu_custom_call.1']
    #allocation5 [shape = 'u8[4096]{0}', space=vmem, size = 0x1000, scoped, tag = 'output window, operand 0, single buffered']
    %6 = vsyncpa [#allocation3], 0
    %7 = vsyncpa [#allocation4], 0
    loop: start=0, step=1, limit=4
    $region2: #{tpu_custom_call.1} parent=1 // loop_pre_header
      _
    $region3: #{tpu_custom_call.1} parent=1 // loop_header
      %s9 = sphi 0, %s13
      %p10 = scmp.ge.s32.totalorder %s9, 4
      %s17 = sphi 0, %s17
      %s19 = sphi 0, %s17
      %s20 = sphi 0, %s19
      %s34 = sphi 0, %s20
      %s38 = sphi 0, %s38
      %s40 = sphi 0, %s38
      %s41 = sphi 0, %s40
      %s55 = sphi 0, %s41
    $region4: #{tpu_custom_call.1} parent=1 // loop_header_branch
      %12 = sbr.rel (%p10) target = $region8
    $region5: #{tpu_custom_call.1} parent=1 // loop_body
      %s14 = ssub.s32 %s9, 1
      %s15 = ssub.s32 %s9, 2
      %s16 = sadd.s32 %s9, 1
      %s18 = sadd.s32 %s17, 1
      %p21 = scmp.eq.s32.totalorder %s9, 1
      %p22 = scmp.ne.s32.totalorder %s17, %s19
      %p23 = scmp.eq.s32.totalorder %s9, 0
      %p24 = por %p22, %p23
      %p25 = scmp.ne.s32.totalorder %s17, %s19
      %p26 = scmp.eq.s32.totalorder %s14, 1
      %p27 = por %p25, %p26
      %p28 = scmp.ne.s32.totalorder %s19, %s20
      %p29 = scmp.eq.s32.totalorder %s14, 0
      %p30 = por %p28, %p29
      %p31 = scmp.ne.s32.totalorder %s19, %s20
      %p32 = scmp.eq.s32.totalorder %s15, 1
      %p33 = por %p31, %p32
      %p35 = scmp.ne.s32.totalorder %s20, %s34
      %p36 = scmp.eq.s32.totalorder %s15, 0
      %p37 = por %p35, %p36
      %s39 = sadd.s32 %s38, 1
      %p42 = scmp.eq.s32.totalorder %s9, 1
      %p43 = scmp.ne.s32.totalorder %s38, %s40
      %p44 = scmp.eq.s32.totalorder %s9, 0
      %p45 = por %p43, %p44
      %p46 = scmp.ne.s32.totalorder %s38, %s40
      %p47 = scmp.eq.s32.totalorder %s14, 1
      %p48 = por %p46, %p47
      %p49 = scmp.ne.s32.totalorder %s40, %s41
      %p50 = scmp.eq.s32.totalorder %s14, 0
      %p51 = por %p49, %p50
      %p52 = scmp.ne.s32.totalorder %s40, %s41
      %p53 = scmp.eq.s32.totalorder %s15, 1
      %p54 = por %p52, %p53
      %p56 = scmp.ne.s32.totalorder %s41, %s55
      %p57 = scmp.eq.s32.totalorder %s15, 0
      %p58 = por %p56, %p57
      %p59 = scmp.le.s32.totalorder 1, %s9
      %p60 = scmp.lt.s32.totalorder %s9, 3
      %p61 = pnand %p59, %p60
      %p62 = pneg %p61
      // Predicated region
      $region9: #{tpu_custom_call.1} parent=5 // pred_check
        _
      $region10: #{tpu_custom_call.1} parent=5 // pred_check_branch
        %64 = sbr.rel (%p61) target = $region12
      $region11: #{tpu_custom_call.1} parent=5 // pred_region
        %s65 = ssub.s32 %s9, 1
        // Predicated region
        $region13: #{tpu_custom_call.1} parent=11 // pred_check
          %p66 = pneg %p30
        $region14: #{tpu_custom_call.1} parent=11 // pred_check_branch
          %68 = sbr.rel (%p66) target = $region16
        $region15: #{tpu_custom_call.1} parent=11 // pred_region
          %s70 = ssub.s32 128, 128
          %71 = vsyncadd [#allocation3], %s70
          %s73 = sshll.u32 [#allocation2], 4
          %s74 = int_to_ptr.vmem [resolvable:$true] %s73
          %76 = dma.hbm_to_vmem [thread:$0]  %s0, 128, %s74, [#allocation3]
        $region16: #{tpu_custom_call.1} parent=11 // pred_fallthru
          _
      $region12: #{tpu_custom_call.1} parent=5 // pred_fallthru
        _
      %p77 = scmp.lt.s32.totalorder %s9, 2
      // Predicated region
      $region17: #{tpu_custom_call.1} parent=5 // pred_check
        %p78 = pneg %p77
      $region18: #{tpu_custom_call.1} parent=5 // pred_check_branch
        %80 = sbr.rel (%p78) target = $region20
      $region19: #{tpu_custom_call.1} parent=5 // pred_region
        _
      $region20: #{tpu_custom_call.1} parent=5 // pred_fallthru
        _
      %p81 = scmp.le.s32.totalorder 1, %s9
      %p82 = scmp.lt.s32.totalorder %s9, 3
      %p83 = pnand %p81, %p82
      %p84 = pneg %p83
      // Predicated region
      $region21: #{tpu_custom_call.1} parent=5 // pred_check
        _
      $region22: #{tpu_custom_call.1} parent=5 // pred_check_branch
        %86 = sbr.rel (%p83) target = $region24
      $region23: #{tpu_custom_call.1} parent=5 // pred_region
        %s87 = ssub.s32 %s9, 1
        // Predicated region
        $region25: #{tpu_custom_call.1} parent=23 // pred_check
          %p88 = pneg %p30
        $region26: #{tpu_custom_call.1} parent=23 // pred_check_branch
          %90 = sbr.rel (%p88) target = $region28
        $region27: #{tpu_custom_call.1} parent=23 // pred_region
          %91 = dma.done [#allocation3], 128
        $region28: #{tpu_custom_call.1} parent=23 // pred_fallthru
          _
        %p92 = pneg %p30
        %p93 = pneg %p27
        %p94 = pneg %p51
        %p95 = pneg %p48
        %v96 = vld [vmem:[#allocation2] sm:$0xff]
        %97 = vst [vmem:[#allocation5] sm:$0xff] %v96
        // Predicated region
        $region29: #{tpu_custom_call.1} parent=23 // pred_check
          %p98 = pneg %p48
        $region30: #{tpu_custom_call.1} parent=23 // pred_check_branch
          %100 = sbr.rel (%p98) target = $region32
        $region31: #{tpu_custom_call.1} parent=23 // pred_region
          %s102 = ssub.s32 128, 128
          %103 = vsyncadd [#allocation4], %s102
          %s105 = sshll.u32 [#allocation5], 4
          %s106 = int_to_ptr.vmem [resolvable:$true] %s105
          %108 = dma.vmem_to_hbm [thread:$0]  %s106, 128, %s1, [#allocation4]
        $region32: #{tpu_custom_call.1} parent=23 // pred_fallthru
          _
        // Predicated region
        $region33: #{tpu_custom_call.1} parent=23 // pred_check
          %p109 = pneg %p48
        $region34: #{tpu_custom_call.1} parent=23 // pred_check_branch
          %111 = sbr.rel (%p109) target = $region36
        $region35: #{tpu_custom_call.1} parent=23 // pred_region
          %112 = dma.done [#allocation4], 128
        $region36: #{tpu_custom_call.1} parent=23 // pred_fallthru
          _
      $region24: #{tpu_custom_call.1} parent=5 // pred_fallthru
        _
      %p113 = scmp.le.s32.totalorder 2, %s9
      // Predicated region
      $region37: #{tpu_custom_call.1} parent=5 // pred_check
        %p114 = pneg %p113
      $region38: #{tpu_custom_call.1} parent=5 // pred_check_branch
        %116 = sbr.rel (%p114) target = $region40
      $region39: #{tpu_custom_call.1} parent=5 // pred_region
        %s117 = ssub.s32 %s9, 2
      $region40: #{tpu_custom_call.1} parent=5 // pred_fallthru
        _
    $region6: #{tpu_custom_call.1} parent=1 // loop_footer
      %s13 = sadd.s32 1, %s9
    $region7: #{tpu_custom_call.1} parent=1 // loop_footer_branch
      %8 = sbr.rel target = $region3
    $region8: #{tpu_custom_call.1} parent=1 // loop_exit
      _
    %118 = vsyncpa [#allocation3], 1
    %s119 = scalar_lea.sflag [#allocation3], 1
    %120 = vsyncpa %s119, 1
    %121 = vsyncpa [#allocation4], 1
    %s122 = scalar_lea.sflag [#allocation4], 1
    %123 = vsyncpa %s122, 1

// kernel: tpu_custom_call.1
$region0: #{tpu_custom_call.1}
  #allocation0 [shape = 'u32[]', space=smem, size = 0x4, offset = 0x4, fixed_abs, tag = 'smem constant byte address 0x4 - core index']
  #allocation1 [shape = 'u32[144,128]{1,0:T(1,128)}', space=vmem, size = 0x12000, scoped, tag = 'internal scratch']
  #allocation2 [shape = 'f32[16,256]{1,0:T(8,128)}', space=vmem, size = 0x4000, scoped, tag = 'scratch operand']
  %s0 = inlined_call_operand.hbm [shape: f32[16,128], index: 0, kind: input, shape index: {}]
  %s1 = inlined_call_operand.hbm [shape: bf16[16,384], index: 1, kind: input, shape index: {}]
  %s2 = inlined_call_operand.hbm [shape: f32[16,128], index: 2, kind: input, shape index: {}]
  %s3 = inlined_call_operand.hbm [shape: f32[24,128], index: 3, kind: input, shape index: {}]
  %s4 = inlined_call_operand.hbm [shape: s32[24,2], index: 4, kind: input, shape index: {}]
  %s5 = inlined_call_operand.hbm [shape: bf16[128,128], index: 5, kind: input, shape index: {}]
  %s6 = inlined_call_operand.hbm [shape: f32[1,128], index: 6, kind: input, shape index: {}]
  %s7 = inlined_call_operand.hbm [shape: f32[4,128], index: 7, kind: input, shape index: {}]
  %s8 = inlined_call_operand.hbm [shape: f32[16,128], index: 8, kind: output, shape index: {0}]
  %s9 = inlined_call_operand.hbm [shape: f32[24,128], index: 9, kind: output, shape index: {1}]
  %10 = xla_tuple %s8, %s9
  %s11 = sld [smem:[#allocation0]]
  $region113: #{tpu_custom_call.1} parent=0
    _
  %s13 = ssub.s32 1, %s11
  %s14 = scalar_select 0, %s13, %s11
  $region1: #{tpu_custom_call.1} parent=0
    #allocation3 [shape = 'u8[8192]{0}', space=vmem, size = 0x2000, scoped, tag = 'input window, operand 0, single buffered']
    #allocation4 [shape = 's32[2]{0}', space=sflag, size = 0x8, scoped, tag = 'scoped memory for tpu_custom_call.1']
    #allocation5 [shape = 's32[2]{0}', space=sflag, size = 0x8, scoped, tag = 'scoped memory for tpu_custom_call.1']
    #allocation6 [shape = 'u8[12288]{0}', space=vmem, size = 0x3000, scoped, tag = 'input window, operand 1, single buffered']
    #allocation7 [shape = 's32[1]{0}', space=sflag, size = 0x4, scoped, tag = 'scoped memory for tpu_custom_call.1']
    #allocation8 [shape = 'u8[8192]{0}', space=vmem, size = 0x2000, scoped, tag = 'input window, operand 2, single buffered']
    #allocation9 [shape = 'u8[8192]{0}', space=vmem, size = 0x2000, scoped, tag = 'input window, operand 3']
    #allocation10 [shape = 's32[2]{0}', space=sflag, size = 0x8, scoped, tag = 'scoped memory for tpu_custom_call.1']
    #allocation11 [shape = 'u8[8192]{0}', space=vmem, size = 0x2000, scoped, tag = 'input window, operand 4']
    #allocation12 [shape = 'u8[32768]{0}', space=vmem, size = 0x8000, scoped, tag = 'input window, operand 5, single buffered']
    #allocation13 [shape = 's32[1]{0}', space=sflag, size = 0x4, scoped, tag = 'scoped memory for tpu_custom_call.1']
    #allocation14 [shape = 'u8[512]{0}', space=vmem, size = 0x400, scoped, tag = 'input window, operand 6, single buffered']
    #allocation15 [shape = 'u8[2048]{0}', space=vmem, size = 0x800, scoped, tag = 'input window, operand 7, single buffered']
    #allocation16 [shape = 's32[1]{0}', space=sflag, size = 0x4, scoped, tag = 'scoped memory for tpu_custom_call.1']
    #allocation17 [shape = 'u8[8192]{0}', space=vmem, size = 0x2000, scoped, tag = 'output window, operand 0, single buffered']
    #allocation18 [shape = 'u8[8192]{0}', space=vmem, size = 0x2000, scoped, tag = 'output window, operand 1']
    #allocation19 [shape = 's32[2]{0}', space=sflag, size = 0x8, scoped, tag = 'scoped memory for tpu_custom_call.1']
    %15 = vsyncpa [#allocation4], 0
    %16 = vsyncpa [#allocation7], 0
    %17 = vsyncpa [#allocation10], 0
    %s18 = scalar_lea.sflag [#allocation10], 1
    %19 = vsyncpa %s18, 0
    %20 = vsyncpa [#allocation13], 0
    %21 = vsyncpa [#allocation16], 0
    %22 = vsyncpa [#allocation5], 0
    %23 = vsyncpa [#allocation19], 0
    %s24 = scalar_lea.sflag [#allocation19], 1
    %25 = vsyncpa %s24, 0
    loop: start=0, step=1, limit=5
    $region2: #{tpu_custom_call.1} parent=1 // loop_pre_header
      _
    $region3: #{tpu_custom_call.1} parent=1 // loop_header
      %s27 = sphi 0, %s31
      %p28 = scmp.ge.s32.totalorder %s27, 5
      %s35 = sphi 0, %s35
      %s37 = sphi 0, %s35
      %s38 = sphi 0, %s37
      %s52 = sphi 0, %s38
      %s56 = sphi 0, %s56
      %s58 = sphi 0, %s56
      %s59 = sphi 0, %s58
      %s73 = sphi 0, %s59
      %s77 = sphi 0, %s77
      %s79 = sphi 0, %s77
      %s80 = sphi 0, %s79
      %s94 = sphi 0, %s80
      %s100 = sphi 0, %s102
      %s103 = sphi 0, %s100
      %s104 = sphi 0, %s103
      %s120 = sphi 0, %s104
      %s126 = sphi 0, %s128
      %s129 = sphi 0, %s126
      %s130 = sphi 0, %s129
      %s146 = sphi 0, %s130
      %s150 = sphi 0, %s150
      %s152 = sphi 0, %s150
      %s153 = sphi 0, %s152
      %s167 = sphi 0, %s153
      %s171 = sphi 0, %s171
      %s173 = sphi 0, %s171
      %s174 = sphi 0, %s173
      %s188 = sphi 0, %s174
      %s192 = sphi 0, %s192
      %s194 = sphi 0, %s192
      %s195 = sphi 0, %s194
      %s209 = sphi 0, %s195
      %s213 = sphi 0, %s213
      %s215 = sphi 0, %s213
      %s216 = sphi 0, %s215
      %s230 = sphi 0, %s216
      %s236 = sphi 0, %s238
      %s239 = sphi 0, %s236
      %s240 = sphi 0, %s239
      %s256 = sphi 0, %s240
    $region4: #{tpu_custom_call.1} parent=1 // loop_header_branch
      %30 = sbr.rel (%p28) target = $region8
    $region5: #{tpu_custom_call.1} parent=1 // loop_body
      %s32 = ssub.s32 %s27, 1
      %s33 = ssub.s32 %s27, 2
      %s34 = sadd.s32 %s27, 1
      %s36 = sadd.s32 %s35, 1
      %p39 = scmp.eq.s32.totalorder %s27, 2
      %p40 = scmp.ne.s32.totalorder %s35, %s37
      %p41 = scmp.eq.s32.totalorder %s27, 0
      %p42 = por %p40, %p41
      %p43 = scmp.ne.s32.totalorder %s35, %s37
      %p44 = scmp.eq.s32.totalorder %s32, 2
      %p45 = por %p43, %p44
      %p46 = scmp.ne.s32.totalorder %s37, %s38
      %p47 = scmp.eq.s32.totalorder %s32, 0
      %p48 = por %p46, %p47
      %p49 = scmp.ne.s32.totalorder %s37, %s38
      %p50 = scmp.eq.s32.totalorder %s33, 2
      %p51 = por %p49, %p50
      %p53 = scmp.ne.s32.totalorder %s38, %s52
      %p54 = scmp.eq.s32.totalorder %s33, 0
      %p55 = por %p53, %p54
      %s57 = sadd.s32 %s56, 1
      %p60 = scmp.eq.s32.totalorder %s27, 2
      %p61 = scmp.ne.s32.totalorder %s56, %s58
      %p62 = scmp.eq.s32.totalorder %s27, 0
      %p63 = por %p61, %p62
      %p64 = scmp.ne.s32.totalorder %s56, %s58
      %p65 = scmp.eq.s32.totalorder %s32, 2
      %p66 = por %p64, %p65
      %p67 = scmp.ne.s32.totalorder %s58, %s59
      %p68 = scmp.eq.s32.totalorder %s32, 0
      %p69 = por %p67, %p68
      %p70 = scmp.ne.s32.totalorder %s58, %s59
      %p71 = scmp.eq.s32.totalorder %s33, 2
      %p72 = por %p70, %p71
      %p74 = scmp.ne.s32.totalorder %s59, %s73
      %p75 = scmp.eq.s32.totalorder %s33, 0
      %p76 = por %p74, %p75
      %s78 = sadd.s32 %s77, 1
      %p81 = scmp.eq.s32.totalorder %s27, 2
      %p82 = scmp.ne.s32.totalorder %s77, %s79
      %p83 = scmp.eq.s32.totalorder %s27, 0
      %p84 = por %p82, %p83
      %p85 = scmp.ne.s32.totalorder %s77, %s79
      %p86 = scmp.eq.s32.totalorder %s32, 2
      %p87 = por %p85, %p86
      %p88 = scmp.ne.s32.totalorder %s79, %s80
      %p89 = scmp.eq.s32.totalorder %s32, 0
      %p90 = por %p88, %p89
      %p91 = scmp.ne.s32.totalorder %s79, %s80
      %p92 = scmp.eq.s32.totalorder %s33, 2
      %p93 = por %p91, %p92
      %p95 = scmp.ne.s32.totalorder %s80, %s94
      %p96 = scmp.eq.s32.totalorder %s33, 0
      %p97 = por %p95, %p96
      %s98 = ssub.s32 %s27, %s34
      %p99 = scmp.eq.s32.totalorder %s98, 0
      %s101 = sadd.s32 %s100, 1
      %s102 = scalar_select %p99, %s100, %s101
      %p105 = pneg %p99
      %p106 = scmp.eq.s32.totalorder %s27, 2
      %p107 = por %p105, %p106
      %p108 = scmp.ne.s32.totalorder %s100, %s103
      %p109 = scmp.eq.s32.totalorder %s27, 0
      %p110 = por %p108, %p109
      %p111 = scmp.ne.s32.totalorder %s100, %s103
      %p112 = scmp.eq.s32.totalorder %s32, 2
      %p113 = por %p111, %p112
      %p114 = scmp.ne.s32.totalorder %s103, %s104
      %p115 = scmp.eq.s32.totalorder %s32, 0
      %p116 = por %p114, %p115
      %p117 = scmp.ne.s32.totalorder %s103, %s104
      %p118 = scmp.eq.s32.totalorder %s33, 2
      %p119 = por %p117, %p118
      %p121 = scmp.ne.s32.totalorder %s104, %s120
      %p122 = scmp.eq.s32.totalorder %s33, 0
      %p123 = por %p121, %p122
      %s124 = ssub.s32 %s27, %s34
      %p125 = scmp.eq.s32.totalorder %s124, 0
      %s127 = sadd.s32 %s126, 1
      %s128 = scalar_select %p125, %s126, %s127
      %p131 = pneg %p125
      %p132 = scmp.eq.s32.totalorder %s27, 2
      %p133 = por %p131, %p132
      %p134 = scmp.ne.s32.totalorder %s126, %s129
      %p135 = scmp.eq.s32.totalorder %s27, 0
      %p136 = por %p134, %p135
      %p137 = scmp.ne.s32.totalorder %s126, %s129
      %p138 = scmp.eq.s32.totalorder %s32, 2
      %p139 = por %p137, %p138
      %p140 = scmp.ne.s32.totalorder %s129, %s130
      %p141 = scmp.eq.s32.totalorder %s32, 0
      %p142 = por %p140, %p141
      %p143 = scmp.ne.s32.totalorder %s129, %s130
      %p144 = scmp.eq.s32.totalorder %s33, 2
      %p145 = por %p143, %p144
      %p147 = scmp.ne.s32.totalorder %s130, %s146
      %p148 = scmp.eq.s32.totalorder %s33, 0
      %p149 = por %p147, %p148
      %s151 = sadd.s32 %s150, 1
      %p154 = scmp.eq.s32.totalorder %s27, 2
      %p155 = scmp.ne.s32.totalorder %s150, %s152
      %p156 = scmp.eq.s32.totalorder %s27, 0
      %p157 = por %p155, %p156
      %p158 = scmp.ne.s32.totalorder %s150, %s152
      %p159 = scmp.eq.s32.totalorder %s32, 2
      %p160 = por %p158, %p159
      %p161 = scmp.ne.s32.totalorder %s152, %s153
      %p162 = scmp.eq.s32.totalorder %s32, 0
      %p163 = por %p161, %p162
      %p164 = scmp.ne.s32.totalorder %s152, %s153
      %p165 = scmp.eq.s32.totalorder %s33, 2
      %p166 = por %p164, %p165
      %p168 = scmp.ne.s32.totalorder %s153, %s167
      %p169 = scmp.eq.s32.totalorder %s33, 0
      %p170 = por %p168, %p169
      %s172 = sadd.s32 %s171, 1
      %p175 = scmp.eq.s32.totalorder %s27, 2
      %p176 = scmp.ne.s32.totalorder %s171, %s173
      %p177 = scmp.eq.s32.totalorder %s27, 0
      %p178 = por %p176, %p177
      %p179 = scmp.ne.s32.totalorder %s171, %s173
      %p180 = scmp.eq.s32.totalorder %s32, 2
      %p181 = por %p179, %p180
      %p182 = scmp.ne.s32.totalorder %s173, %s174
      %p183 = scmp.eq.s32.totalorder %s32, 0
      %p184 = por %p182, %p183
      %p185 = scmp.ne.s32.totalorder %s173, %s174
      %p186 = scmp.eq.s32.totalorder %s33, 2
      %p187 = por %p185, %p186
      %p189 = scmp.ne.s32.totalorder %s174, %s188
      %p190 = scmp.eq.s32.totalorder %s33, 0
      %p191 = por %p189, %p190
      %s193 = sadd.s32 %s192, 1
      %p196 = scmp.eq.s32.totalorder %s27, 2
      %p197 = scmp.ne.s32.totalorder %s192, %s194
      %p198 = scmp.eq.s32.totalorder %s27, 0
      %p199 = por %p197, %p198
      %p200 = scmp.ne.s32.totalorder %s192, %s194
      %p201 = scmp.eq.s32.totalorder %s32, 2
      %p202 = por %p200, %p201
      %p203 = scmp.ne.s32.totalorder %s194, %s195
      %p204 = scmp.eq.s32.totalorder %s32, 0
      %p205 = por %p203, %p204
      %p206 = scmp.ne.s32.totalorder %s194, %s195
      %p207 = scmp.eq.s32.totalorder %s33, 2
      %p208 = por %p206, %p207
      %p210 = scmp.ne.s32.totalorder %s195, %s209
      %p211 = scmp.eq.s32.totalorder %s33, 0
      %p212 = por %p210, %p211
      %s214 = sadd.s32 %s213, 1
      %p217 = scmp.eq.s32.totalorder %s27, 2
      %p218 = scmp.ne.s32.totalorder %s213, %s215
      %p219 = scmp.eq.s32.totalorder %s27, 0
      %p220 = por %p218, %p219
      %p221 = scmp.ne.s32.totalorder %s213, %s215
      %p222 = scmp.eq.s32.totalorder %s32, 2
      %p223 = por %p221, %p222
      %p224 = scmp.ne.s32.totalorder %s215, %s216
      %p225 = scmp.eq.s32.totalorder %s32, 0
      %p226 = por %p224, %p225
      %p227 = scmp.ne.s32.totalorder %s215, %s216
      %p228 = scmp.eq.s32.totalorder %s33, 2
      %p229 = por %p227, %p228
      %p231 = scmp.ne.s32.totalorder %s216, %s230
      %p232 = scmp.eq.s32.totalorder %s33, 0
      %p233 = por %p231, %p232
      %s234 = ssub.s32 %s27, %s34
      %p235 = scmp.eq.s32.totalorder %s234, 0
      %s237 = sadd.s32 %s236, 1
      %s238 = scalar_select %p235, %s236, %s237
      %p241 = pneg %p235
      %p242 = scmp.eq.s32.totalorder %s27, 2
      %p243 = por %p241, %p242
      %p244 = scmp.ne.s32.totalorder %s236, %s239
      %p245 = scmp.eq.s32.totalorder %s27, 0
      %p246 = por %p244, %p245
      %p247 = scmp.ne.s32.totalorder %s236, %s239
      %p248 = scmp.eq.s32.totalorder %s32, 2
      %p249 = por %p247, %p248
      %p250 = scmp.ne.s32.totalorder %s239, %s240
      %p251 = scmp.eq.s32.totalorder %s32, 0
      %p252 = por %p250, %p251
      %p253 = scmp.ne.s32.totalorder %s239, %s240
      %p254 = scmp.eq.s32.totalorder %s33, 2
      %p255 = por %p253, %p254
      %p257 = scmp.ne.s32.totalorder %s240, %s256
      %p258 = scmp.eq.s32.totalorder %s33, 0
      %p259 = por %p257, %p258
      %p260 = scmp.le.s32.totalorder 1, %s27
      %p261 = scmp.lt.s32.totalorder %s27, 4
      %p262 = pnand %p260, %p261
      %p263 = pneg %p262
      // Predicated region
      $region9: #{tpu_custom_call.1} parent=5 // pred_check
        _
      $region10: #{tpu_custom_call.1} parent=5 // pred_check_branch
        %265 = sbr.rel (%p262) target = $region12
      $region11: #{tpu_custom_call.1} parent=5 // pred_region
        %s266 = ssub.s32 %s27, 1
        // Predicated region
        $region13: #{tpu_custom_call.1} parent=11 // pred_check
          %p267 = pneg %p48
        $region14: #{tpu_custom_call.1} parent=11 // pred_check_branch
          %269 = sbr.rel (%p267) target = $region16
        $region15: #{tpu_custom_call.1} parent=11 // pred_region
          %s271 = ssub.s32 256, 256
          %272 = vsyncadd [#allocation4], %s271
          %s273 = sshll.u32 [#allocation3], 4
          %s274 = int_to_ptr.vmem [resolvable:$true] %s273
          %279 = dma.hbm_to_vmem [thread:$0]  %s0, 256, %s274, [#allocation4], 128, 128, 8
        $region16: #{tpu_custom_call.1} parent=11 // pred_fallthru
          _
        // Predicated region
        $region17: #{tpu_custom_call.1} parent=11 // pred_check
          %p280 = pneg %p69
        $region18: #{tpu_custom_call.1} parent=11 // pred_check_branch
          %282 = sbr.rel (%p280) target = $region20
        $region19: #{tpu_custom_call.1} parent=11 // pred_region
          %s284 = ssub.s32 384, 384
          %285 = vsyncadd [#allocation7], %s284
          %s286 = sshll.u32 [#allocation6], 4
          %s287 = int_to_ptr.vmem [resolvable:$true] %s286
          %292 = dma.hbm_to_vmem [thread:$0]  %s1, 384, %s287, [#allocation7], 192, 192, 12
        $region20: #{tpu_custom_call.1} parent=11 // pred_fallthru
          _
        // Predicated region
        $region21: #{tpu_custom_call.1} parent=11 // pred_check
          %p293 = pneg %p90
        $region22: #{tpu_custom_call.1} parent=11 // pred_check_branch
          %295 = sbr.rel (%p293) target = $region24
        $region23: #{tpu_custom_call.1} parent=11 // pred_region
          %s297 = ssub.s32 256, 256
          %298 = vsyncadd [#allocation7], %s297
          %s299 = sshll.u32 [#allocation8], 4
          %s300 = int_to_ptr.vmem [resolvable:$true] %s299
          %305 = dma.hbm_to_vmem [thread:$0]  %s2, 256, %s300, [#allocation7], 128, 128, 8
        $region24: #{tpu_custom_call.1} parent=11 // pred_fallthru
          _
        // Predicated region
        $region25: #{tpu_custom_call.1} parent=11 // pred_check
          %p306 = pneg %p163
        $region26: #{tpu_custom_call.1} parent=11 // pred_check_branch
          %308 = sbr.rel (%p306) target = $region28
        $region27: #{tpu_custom_call.1} parent=11 // pred_region
          %s310 = ssub.s32 1024, 1024
          %311 = vsyncadd [#allocation13], %s310
          %s312 = sshll.u32 [#allocation12], 4
          %s313 = int_to_ptr.vmem [resolvable:$true] %s312
          %318 = dma.hbm_to_vmem [thread:$0]  %s5, 1024, %s313, [#allocation13], 64, 64, 4
        $region28: #{tpu_custom_call.1} parent=11 // pred_fallthru
          _
        // Predicated region
        $region29: #{tpu_custom_call.1} parent=11 // pred_check
          %p319 = pneg %p184
        $region30: #{tpu_custom_call.1} parent=11 // pred_check_branch
          %321 = sbr.rel (%p319) target = $region32
        $region31: #{tpu_custom_call.1} parent=11 // pred_region
          %s323 = ssub.s32 16, 16
          %324 = vsyncadd [#allocation13], %s323
          %s326 = sshll.u32 [#allocation14], 4
          %s327 = int_to_ptr.vmem [resolvable:$true] %s326
          %329 = dma.hbm_to_vmem [thread:$0]  %s6, 16, %s327, [#allocation13]
        $region32: #{tpu_custom_call.1} parent=11 // pred_fallthru
          _
        // Predicated region
        $region33: #{tpu_custom_call.1} parent=11 // pred_check
          %p330 = pneg %p205
        $region34: #{tpu_custom_call.1} parent=11 // pred_check_branch
          %332 = sbr.rel (%p330) target = $region36
        $region35: #{tpu_custom_call.1} parent=11 // pred_region
          %s334 = ssub.s32 64, 64
          %335 = vsyncadd [#allocation16], %s334
          %s337 = sshll.u32 [#allocation15], 4
          %s338 = int_to_ptr.vmem [resolvable:$true] %s337
          %340 = dma.hbm_to_vmem [thread:$0]  %s7, 64, %s338, [#allocation16]
        $region36: #{tpu_custom_call.1} parent=11 // pred_fallthru
          _
      $region12: #{tpu_custom_call.1} parent=5 // pred_fallthru
        _
      %p341 = scmp.lt.s32.totalorder %s27, 3
      // Predicated region
      $region37: #{tpu_custom_call.1} parent=5 // pred_check
        %p342 = pneg %p341
      $region38: #{tpu_custom_call.1} parent=5 // pred_check_branch
        %344 = sbr.rel (%p342) target = $region40
      $region39: #{tpu_custom_call.1} parent=5 // pred_region
        // Predicated region
        $region41: #{tpu_custom_call.1} parent=39 // pred_check
          %p345 = pneg %p110
        $region42: #{tpu_custom_call.1} parent=39 // pred_check_branch
          %347 = sbr.rel (%p345) target = $region44
        $region43: #{tpu_custom_call.1} parent=39 // pred_region
          %s348 = sand.u32 %s27, 1
          %s349 = scalar_lea.sflag [#allocation10], %s348
          %s350 = sand.u32 %s100, 1
          %s351 = smul.addr %s350, 8
          %s352 = scalar_lea.vmem [#allocation9], %s351
          %s354 = ssub.s32 128, 128
          %355 = vsyncadd %s349, %s354
          %s356 = smul.addr %s27, 128
          %s357 = scalar_lea.hbm %s3, %s356
          %s359 = sshll.u32 %s352, 4
          %s360 = int_to_ptr.vmem [resolvable:$true] %s359
          %362 = dma.hbm_to_vmem [thread:$0]  %s357, 128, %s360, %s349
        $region44: #{tpu_custom_call.1} parent=39 // pred_fallthru
          _
        // Predicated region
        $region45: #{tpu_custom_call.1} parent=39 // pred_check
          %p363 = pneg %p136
        $region46: #{tpu_custom_call.1} parent=39 // pred_check_branch
          %365 = sbr.rel (%p363) target = $region48
        $region47: #{tpu_custom_call.1} parent=39 // pred_region
          %s366 = sand.u32 %s27, 1
          %s367 = scalar_lea.sflag [#allocation10], %s366
          %s368 = sand.u32 %s126, 1
          %s369 = smul.addr %s368, 8
          %s370 = scalar_lea.vmem [#allocation11], %s369
          %s372 = ssub.s32 128, 128
          %373 = vsyncadd %s367, %s372
          %s374 = smul.addr %s27, 128
          %s375 = scalar_lea.hbm %s4, %s374
          %s377 = sshll.u32 %s370, 4
          %s378 = int_to_ptr.vmem [resolvable:$true] %s377
          %380 = dma.hbm_to_vmem [thread:$0]  %s375, 128, %s378, %s367
        $region48: #{tpu_custom_call.1} parent=39 // pred_fallthru
          _
      $region40: #{tpu_custom_call.1} parent=5 // pred_fallthru
        _
      %p381 = scmp.le.s32.totalorder 1, %s27
      %p382 = scmp.lt.s32.totalorder %s27, 4
      %p383 = pnand %p381, %p382
      %p384 = pneg %p383
      // Predicated region
      $region49: #{tpu_custom_call.1} parent=5 // pred_check
        _
      $region50: #{tpu_custom_call.1} parent=5 // pred_check_branch
        %386 = sbr.rel (%p383) target = $region52
      $region51: #{tpu_custom_call.1} parent=5 // pred_region
        %s387 = ssub.s32 %s27, 1
        // Predicated region
        $region53: #{tpu_custom_call.1} parent=51 // pred_check
          %p388 = pneg %p48
        $region54: #{tpu_custom_call.1} parent=51 // pred_check_branch
          %390 = sbr.rel (%p388) target = $region56
        $region55: #{tpu_custom_call.1} parent=51 // pred_region
          %391 = dma.done [#allocation4], 256
        $region56: #{tpu_custom_call.1} parent=51 // pred_fallthru
          _
        // Predicated region
        $region57: #{tpu_custom_call.1} parent=51 // pred_check
          %p392 = pneg %p69
        $region58: #{tpu_custom_call.1} parent=51 // pred_check_branch
          %394 = sbr.rel (%p392) target = $region60
        $region59: #{tpu_custom_call.1} parent=51 // pred_region
          %395 = dma.done [#allocation7], 384
        $region60: #{tpu_custom_call.1} parent=51 // pred_fallthru
          _
        // Predicated region
        $region61: #{tpu_custom_call.1} parent=51 // pred_check
          %p396 = pneg %p90
        $region62: #{tpu_custom_call.1} parent=51 // pred_check_branch
          %398 = sbr.rel (%p396) target = $region64
        $region63: #{tpu_custom_call.1} parent=51 // pred_region
          %399 = dma.done [#allocation7], 256
        $region64: #{tpu_custom_call.1} parent=51 // pred_fallthru
          _
        %s400 = sand.u32 %s32, 1
        %s401 = scalar_lea.sflag [#allocation10], %s400
        %s402 = sand.u32 %s103, 1
        %s403 = smul.addr %s402, 8
        %s404 = scalar_lea.vmem [#allocation9], %s403
        // Predicated region
        $region65: #{tpu_custom_call.1} parent=51 // pred_check
          %p405 = pneg %p116
        $region66: #{tpu_custom_call.1} parent=51 // pred_check_branch
          %407 = sbr.rel (%p405) target = $region68
        $region67: #{tpu_custom_call.1} parent=51 // pred_region
          %408 = dma.done %s401, 128
        $region68: #{tpu_custom_call.1} parent=51 // pred_fallthru
          _
        %s409 = sand.u32 %s32, 1
        %s410 = scalar_lea.sflag [#allocation10], %s409
        %s411 = sand.u32 %s129, 1
        %s412 = smul.addr %s411, 8
        %s413 = scalar_lea.vmem [#allocation11], %s412
        // Predicated region
        $region69: #{tpu_custom_call.1} parent=51 // pred_check
          %p414 = pneg %p142
        $region70: #{tpu_custom_call.1} parent=51 // pred_check_branch
          %416 = sbr.rel (%p414) target = $region72
        $region71: #{tpu_custom_call.1} parent=51 // pred_region
          %417 = dma.done %s410, 128
        $region72: #{tpu_custom_call.1} parent=51 // pred_fallthru
          _
        // Predicated region
        $region73: #{tpu_custom_call.1} parent=51 // pred_check
          %p418 = pneg %p163
        $region74: #{tpu_custom_call.1} parent=51 // pred_check_branch
          %420 = sbr.rel (%p418) target = $region76
        $region75: #{tpu_custom_call.1} parent=51 // pred_region
          %421 = dma.done [#allocation13], 1024
        $region76: #{tpu_custom_call.1} parent=51 // pred_fallthru
          _
        // Predicated region
        $region77: #{tpu_custom_call.1} parent=51 // pred_check
          %p422 = pneg %p184
        $region78: #{tpu_custom_call.1} parent=51 // pred_check_branch
          %424 = sbr.rel (%p422) target = $region80
        $region79: #{tpu_custom_call.1} parent=51 // pred_region
          %425 = dma.done [#allocation13], 16
        $region80: #{tpu_custom_call.1} parent=51 // pred_fallthru
          _
        // Predicated region
        $region81: #{tpu_custom_call.1} parent=51 // pred_check
          %p426 = pneg %p205
        $region82: #{tpu_custom_call.1} parent=51 // pred_check_branch
          %428 = sbr.rel (%p426) target = $region84
        $region83: #{tpu_custom_call.1} parent=51 // pred_region
          %429 = dma.done [#allocation16], 64
        $region84: #{tpu_custom_call.1} parent=51 // pred_fallthru
          _
        %p430 = pneg %p48
        %p431 = pneg %p45
        %p432 = pneg %p69
        %p433 = pneg %p66
        %p434 = pneg %p90
        %p435 = pneg %p87
        %s436 = sand.u32 %s32, 1
        %s437 = scalar_lea.sflag [#allocation10], %s436
        %s438 = sand.u32 %s103, 1
        %s439 = smul.addr %s438, 8
        %s440 = scalar_lea.vmem [#allocation9], %s439
        %p441 = pneg %p116
        %p442 = pneg %p113
        %s443 = sand.u32 %s32, 1
        %s444 = scalar_lea.sflag [#allocation10], %s443
        %s445 = sand.u32 %s129, 1
        %s446 = smul.addr %s445, 8
        %s447 = scalar_lea.vmem [#allocation11], %s446
        %p448 = pneg %p142
        %p449 = pneg %p139
        %p450 = pneg %p163
        %p451 = pneg %p160
        %p452 = pneg %p184
        %p453 = pneg %p181
        %p454 = pneg %p205
        %p455 = pneg %p202
        %p456 = pneg %p226
        %p457 = pneg %p223
        %p458 = pneg %p252
        %p459 = pneg %p249
        %s460 = sand.u32 %s239, 1
        %s461 = scalar_lea.sflag [#allocation19], %s460
        %s462 = sand.u32 %s239, 1
        %s463 = smul.addr %s462, 8
        %s464 = scalar_lea.vmem [#allocation18], %s463
        %p466 = scmp.eq.s32.totalorder %s32, 0
        // Predicated region
        $region85: #{tpu_custom_call.1} parent=51 // pred_check
          %p467 = pneg %p466
        $region86: #{tpu_custom_call.1} parent=51 // pred_check_branch
          %469 = sbr.rel (%p467) target = $region88
        $region87: #{tpu_custom_call.1} parent=51 // pred_region
          %470 = vst [vmem:[#allocation2] sm:$0xff] 0.0
          %471 = vst [vmem:[#allocation2 + $0x8] sm:$0xff] 0.0
          %472 = vst [vmem:[#allocation2 + $0x10] sm:$0xff] 0.0
          %473 = vst [vmem:[#allocation2 + $0x18] sm:$0xff] 0.0
        $region88: #{tpu_custom_call.1} parent=51 // pred_fallthru
          _
        %v474 = vlaneseq
        %v475 = vand.u32 %v474, 127
        %vm476 = vcmp.lt.s32.totalorder %v475, 32
        %v477 = vsel %vm476, 1, 0
        %v478 = vcvt.s32.f32 %v477
        %v479 = vld [vmem:[%s404] sm:$0xff]
        %v480 = vld [vmem:[%s413] sm:$0xff]
        %481 = vset.pattern.permute.xlu0 0
        %482 = vperm.xlu0 %481, %v480
        %v483 = vpop.permute.xlu0 %482
        %vm484 = vcmp.eq.s32.totalorder %v475, %v483
        %v485 = vsel %vm484, 1, 0
        %v486 = vcvt.s32.f32 %v485
        %v487 = vpack.c.bf16 %v486, %v486
        %488 = vset.pattern.permute.xlu0 1
        %489 = vperm.xlu0 %488, %v480
        %v490 = vpop.permute.xlu0 %489
        %vm491 = vcmp.eq.s32.totalorder %v475, %v490
        %v492 = vsel %vm491, 1, 0
        %v493 = vcvt.s32.f32 %v492
        %v494 = vpack.c.bf16 %v493, %v493
        %v495 = vld [vmem:[#allocation6] sm:$0xff]
        %v496 = vld [vmem:[#allocation6 + $0xc] sm:$0xff]
        %v499 = vunpack.c.l.b16 %v495
        %v500 = vunpack.c.h.b16 %v495
        %v501 = vunpack.c.l.b16 %v496
        %v502 = vunpack.c.h.b16 %v496
        %v503 = vpack.c.b16 %v501, %v499
        %v504 = vpack.c.b16 %v502, %v500
        %vm507 = vcmask 130048
        %v509 = vsel %vm507, %v487, 0
        %511 = vmatprep.subr.bf16.mxu0 %v504
        %512 = vmatpush1.bf16.msra.mxu0 %v503
        %513 = vmatprep.subr.bf16.mxu0 0
        %514 = vmatpush1.bf16.msra.mxu0 0
        %515 = vmatprep.subr.bf16.mxu0 0
        %516 = vmatpush1.bf16.msra.mxu0 0
        %517 = vmatprep.subr.bf16.mxu0 0
        %518 = vmatpush1.bf16.msra.mxu0 0
        %519 = vmatprep.subr.bf16.mxu0 0
        %520 = vmatpush1.bf16.msra.mxu0 0
        %521 = vmatprep.subr.bf16.mxu0 0
        %522 = vmatpush1.bf16.msra.mxu0 0
        %523 = vmatprep.subr.bf16.mxu0 0
        %524 = vmatpush1.bf16.msra.mxu0 0
        %525 = vmatprep.subr.bf16.mxu0 0
        %526 = vmatpush1.bf16.msra.mxu0 0
        %527 = vmatprep.subr.bf16.mxu0 0
        %528 = vmatpush1.bf16.msra.mxu0 0
        %529 = vmatprep.subr.bf16.mxu0 0
        %530 = vmatpush1.bf16.msra.mxu0 0
        %531 = vmatprep.subr.bf16.mxu0 0
        %532 = vmatpush1.bf16.msra.mxu0 0
        %533 = vmatprep.subr.bf16.mxu0 0
        %534 = vmatpush1.bf16.msra.mxu0 0
        %535 = vmatprep.subr.bf16.mxu0 0
        %536 = vmatpush1.bf16.msra.mxu0 0
        %537 = vmatprep.subr.bf16.mxu0 0
        %538 = vmatpush1.bf16.msra.mxu0 0
        %539 = vmatprep.subr.bf16.mxu0 0
        %540 = vmatpush1.bf16.msra.mxu0 0
        %541 = vmatprep.subr.bf16.mxu0 0
        %542 = vmatpush1.bf16.msra.mxu0 0
        %543 = vmatprep.mubr.bf16.mxu0 0
        %544 = vmatmul.mubr.bf16.gmra.mrb[0].mxu0 %v509
        %v545 = vpop.f32.mrb[0].mxu0
        %v546 = vadd.f32 0.0, %v545
        %v547 = vpop.f32.mrb[0].mxu0
        %v548 = vadd.f32 0.0, %v547
        %v549 = vpop.f32.mrb[0].mxu0
        %v550 = vpop.f32.mrb[0].mxu0
        %551 = vdwg.mxu0
        %v552 = vld [vmem:[#allocation6 + $0x8] sm:$0xf]
        %v553 = vld [vmem:[#allocation6 + $0x14] sm:$0xf]
        %v556 = vunpack.c.l.b16 %v552
        %v557 = vunpack.c.l.b16 %v553
        %v558 = vpack.c.b16 %v557, %v556
        %v561 = vsel %vm507, %v494, 0
        %563 = vmatprep.subr.bf16.mxu0 0
        %564 = vmatpush1.bf16.msra.mxu0 %v558
        %565 = vmatprep.subr.bf16.mxu0 0
        %566 = vmatpush1.bf16.msra.mxu0 0
        %567 = vmatprep.subr.bf16.mxu0 0
        %568 = vmatpush1.bf16.msra.mxu0 0
        %569 = vmatprep.subr.bf16.mxu0 0
        %570 = vmatpush1.bf16.msra.mxu0 0
        %571 = vmatprep.subr.bf16.mxu0 0
        %572 = vmatpush1.bf16.msra.mxu0 0
        %573 = vmatprep.subr.bf16.mxu0 0
        %574 = vmatpush1.bf16.msra.mxu0 0
        %575 = vmatprep.subr.bf16.mxu0 0
        %576 = vmatpush1.bf16.msra.mxu0 0
        %577 = vmatprep.subr.bf16.mxu0 0
        %578 = vmatpush1.bf16.msra.mxu0 0
        %579 = vmatprep.subr.bf16.mxu0 0
        %580 = vmatpush1.bf16.msra.mxu0 0
        %581 = vmatprep.subr.bf16.mxu0 0
        %582 = vmatpush1.bf16.msra.mxu0 0
        %583 = vmatprep.subr.bf16.mxu0 0
        %584 = vmatpush1.bf16.msra.mxu0 0
        %585 = vmatprep.subr.bf16.mxu0 0
        %586 = vmatpush1.bf16.msra.mxu0 0
        %587 = vmatprep.subr.bf16.mxu0 0
        %588 = vmatpush1.bf16.msra.mxu0 0
        %589 = vmatprep.subr.bf16.mxu0 0
        %590 = vmatpush1.bf16.msra.mxu0 0
        %591 = vmatprep.subr.bf16.mxu0 0
        %592 = vmatpush1.bf16.msra.mxu0 0
        %593 = vmatprep.subr.bf16.mxu0 0
        %594 = vmatpush1.bf16.msra.mxu0 0
        %595 = vmatprep.mubr.bf16.mxu0 0
        %596 = vmatmul.mubr.bf16.gmra.mrb[0].mxu0 %v561
        %v597 = vpop.f32.mrb[0].mxu0
        %v598 = vadd.f32 0.0, %v597
        %v599 = vpop.f32.mrb[0].mxu0
        %v600 = vpop.f32.mrb[0].mxu0
        %v601 = vpop.f32.mrb[0].mxu0
        %602 = vdwg.mxu0
        %v603 = vpack.c.bf16 %v479, %v479
        %v604 = vld [vmem:[#allocation12] sm:$0xf]
        %v605 = vld [vmem:[#allocation12 + $0x4] sm:$0xf]
        %v606 = vld [vmem:[#allocation12 + $0x8] sm:$0xf]
        %v607 = vld [vmem:[#allocation12 + $0xc] sm:$0xf]
        %v608 = vld [vmem:[#allocation12 + $0x10] sm:$0xf]
        %v609 = vld [vmem:[#allocation12 + $0x14] sm:$0xf]
        %v610 = vld [vmem:[#allocation12 + $0x18] sm:$0xf]
        %v611 = vld [vmem:[#allocation12 + $0x1c] sm:$0xf]
        %v612 = vld [vmem:[#allocation12 + $0x20] sm:$0xf]
        %v613 = vld [vmem:[#allocation12 + $0x24] sm:$0xf]
        %v614 = vld [vmem:[#allocation12 + $0x28] sm:$0xf]
        %v615 = vld [vmem:[#allocation12 + $0x2c] sm:$0xf]
        %v616 = vld [vmem:[#allocation12 + $0x30] sm:$0xf]
        %v617 = vld [vmem:[#allocation12 + $0x34] sm:$0xf]
        %v618 = vld [vmem:[#allocation12 + $0x38] sm:$0xf]
        %v619 = vld [vmem:[#allocation12 + $0x3c] sm:$0xf]
        %v620 = vld [vmem:[#allocation14] sm:$0x1]
        %v622 = vlaneseq
        %v623 = vshrl.u32 %v622, 7
        %v624 = vsub.s32 0, %v623
        %v625 = vrot.slane %v620, %v624
        %v643 = vunpack.c.l.b16 %v604
        %v644 = vunpack.c.l.b16 %v605
        %v645 = vunpack.c.l.b16 %v606
        %v646 = vunpack.c.l.b16 %v607
        %v647 = vunpack.c.l.b16 %v608
        %v648 = vunpack.c.l.b16 %v609
        %v649 = vunpack.c.l.b16 %v610
        %v650 = vunpack.c.l.b16 %v611
        %v651 = vunpack.c.l.b16 %v612
        %v652 = vunpack.c.l.b16 %v613
        %v653 = vunpack.c.l.b16 %v614
        %v654 = vunpack.c.l.b16 %v615
        %v655 = vunpack.c.l.b16 %v616
        %v656 = vunpack.c.l.b16 %v617
        %v657 = vunpack.c.l.b16 %v618
        %v658 = vunpack.c.l.b16 %v619
        %v659 = vpack.c.b16 %v644, %v643
        %v660 = vpack.c.b16 %v646, %v645
        %v661 = vpack.c.b16 %v648, %v647
        %v662 = vpack.c.b16 %v650, %v649
        %v663 = vpack.c.b16 %v652, %v651
        %v664 = vpack.c.b16 %v654, %v653
        %v665 = vpack.c.b16 %v656, %v655
        %v666 = vpack.c.b16 %v658, %v657
        %675 = vmatprep.subr.bf16.mxu0 0
        %676 = vmatpush1.bf16.msra.mxu0 %v659
        %677 = vmatprep.subr.bf16.mxu0 0
        %678 = vmatpush1.bf16.msra.mxu0 %v660
        %679 = vmatprep.subr.bf16.mxu0 0
        %680 = vmatpush1.bf16.msra.mxu0 %v661
        %681 = vmatprep.subr.bf16.mxu0 0
        %682 = vmatpush1.bf16.msra.mxu0 %v662
        %683 = vmatprep.subr.bf16.mxu0 0
        %684 = vmatpush1.bf16.msra.mxu0 %v663
        %685 = vmatprep.subr.bf16.mxu0 0
        %686 = vmatpush1.bf16.msra.mxu0 %v664
        %687 = vmatprep.subr.bf16.mxu0 0
        %688 = vmatpush1.bf16.msra.mxu0 %v665
        %689 = vmatprep.subr.bf16.mxu0 0
        %690 = vmatpush1.bf16.msra.mxu0 %v666
        %691 = vmatprep.subr.bf16.mxu0 0
        %692 = vmatpush1.bf16.msra.mxu0 0
        %693 = vmatprep.subr.bf16.mxu0 0
        %694 = vmatpush1.bf16.msra.mxu0 0
        %695 = vmatprep.subr.bf16.mxu0 0
        %696 = vmatpush1.bf16.msra.mxu0 0
        %697 = vmatprep.subr.bf16.mxu0 0
        %698 = vmatpush1.bf16.msra.mxu0 0
        %699 = vmatprep.subr.bf16.mxu0 0
        %700 = vmatpush1.bf16.msra.mxu0 0
        %701 = vmatprep.subr.bf16.mxu0 0
        %702 = vmatpush1.bf16.msra.mxu0 0
        %703 = vmatprep.subr.bf16.mxu0 0
        %704 = vmatpush1.bf16.msra.mxu0 0
        %705 = vmatprep.subr.bf16.mxu0 0
        %706 = vmatpush1.bf16.msra.mxu0 0
        %707 = vmatprep.mubr.bf16.mxu0 0
        %708 = vmatmul.mubr.bf16.gmra.mrb[0].mxu0 %v603
        %v709 = vpop.f32.mrb[0].mxu0
        %v710 = vadd.f32 %v625, %v709
        %v711 = vpop.f32.mrb[0].mxu0
        %v712 = vpop.f32.mrb[0].mxu0
        %v713 = vpop.f32.mrb[0].mxu0
        %714 = vdwg.mxu0
        %v715 = vadd.f32 %v546, %v598
        %v716 = vadd.f32 %v715, %v710
        %v717 = vxor.u32 %v716, 2147483648
        %v718 = vmul.f32 %v717, 1.442695
        %v719 = vpow.pop %v718
        %v720 = vadd.f32 %v719, 1.0
        %v721 = vrcp.pop %v720
        %v722 = vmul.f32 1.0, %v721
        %v723 = vmul.f32 %v548, %v722
        %v724 = vpack.c.bf16 %v723, %v723
        %v725 = vpack.c.bf16 %v722, %v722
        %v726 = vld [vmem:[#allocation2] sm:$0xff]
        %v727 = vld [vmem:[#allocation2 + $0x8] sm:$0xff]
        %v728 = vld [vmem:[#allocation2 + $0x10] sm:$0xff]
        %v729 = vld [vmem:[#allocation2 + $0x18] sm:$0xff]
        %730 = vxpose.xlu0.c.b16.start [1/8] %v494, 128
        %731 = vxpose.xlu0.c.b16.cont [2/8] 0, 128
        %732 = vxpose.xlu0.c.b16.cont [3/8] 0, 128
        %733 = vxpose.xlu0.c.b16.cont [4/8] 0, 128
        %734 = vxpose.xlu0.c.b16.cont [5/8] 0, 128
        %735 = vxpose.xlu0.c.b16.cont [6/8] 0, 128
        %736 = vxpose.xlu0.c.b16.cont [7/8] 0, 128
        %737 = vxpose.xlu0.c.b16.end [8/8] 0, 128
        %v738 = vpop.trf.xlu0
        %v739 = vpop.trf.xlu0
        %v740 = vpop.trf.xlu0
        %v741 = vpop.trf.xlu0
        %v742 = vpop.trf.xlu0
        %v743 = vpop.trf.xlu0
        %v744 = vpop.trf.xlu0
        %v745 = vpop.trf.xlu0
        %vm746 = vcmask 64512
        %v748 = vsel %vm746, %v738, 0
        %vm750 = vcmask 1043456
        %v752 = vsel %vm750, %v724, 0
        %v755 = vsel %vm750, %v725, 0
        %757 = vmatprep.subr.bf16.mxu0 %v755
        %758 = vmatpush1.bf16.msra.mxu0 %v752
        %759 = vmatprep.subr.bf16.mxu0 0
        %760 = vmatpush1.bf16.msra.mxu0 0
        %761 = vmatprep.subr.bf16.mxu0 0
        %762 = vmatpush1.bf16.msra.mxu0 0
        %763 = vmatprep.subr.bf16.mxu0 0
        %764 = vmatpush1.bf16.msra.mxu0 0
        %765 = vmatprep.subr.bf16.mxu0 0
        %766 = vmatpush1.bf16.msra.mxu0 0
        %767 = vmatprep.subr.bf16.mxu0 0
        %768 = vmatpush1.bf16.msra.mxu0 0
        %769 = vmatprep.subr.bf16.mxu0 0
        %770 = vmatpush1.bf16.msra.mxu0 0
        %771 = vmatprep.subr.bf16.mxu0 0
        %772 = vmatpush1.bf16.msra.mxu0 0
        %773 = vmatprep.subr.bf16.mxu0 0
        %774 = vmatpush1.bf16.msra.mxu0 0
        %775 = vmatprep.subr.bf16.mxu0 0
        %776 = vmatpush1.bf16.msra.mxu0 0
        %777 = vmatprep.subr.bf16.mxu0 0
        %778 = vmatpush1.bf16.msra.mxu0 0
        %779 = vmatprep.subr.bf16.mxu0 0
        %780 = vmatpush1.bf16.msra.mxu0 0
        %781 = vmatprep.subr.bf16.mxu0 0
        %782 = vmatpush1.bf16.msra.mxu0 0
        %783 = vmatprep.subr.bf16.mxu0 0
        %784 = vmatpush1.bf16.msra.mxu0 0
        %785 = vmatprep.subr.bf16.mxu0 0
        %786 = vmatpush1.bf16.msra.mxu0 0
        %787 = vmatprep.subr.bf16.mxu0 0
        %788 = vmatpush1.bf16.msra.mxu0 0
        %789 = vmatprep.mubr.bf16.mxu0 0
        %790 = vmatmul.mubr.bf16.gmra.mrb[0].mxu0 %v748
        %v791 = vpop.f32.mrb[0].mxu0
        %v792 = vadd.f32 0.0, %v791
        %v793 = vpop.f32.mrb[0].mxu0
        %v794 = vadd.f32 0.0, %v793
        %v795 = vpop.f32.mrb[0].mxu0
        %v796 = vadd.f32 0.0, %v795
        %v797 = vpop.f32.mrb[0].mxu0
        %v798 = vadd.f32 0.0, %v797
        %799 = vdwg.mxu0
        %v800 = vadd.f32 %v726, %v792
        %v801 = vadd.f32 %v727, %v794
        %v802 = vadd.f32 %v728, %v796
        %v803 = vadd.f32 %v729, %v798
        %804 = vst [vmem:[#allocation2] sm:$0xff] %v800
        %805 = vst [vmem:[#allocation2 + $0x8] sm:$0xff] %v801
        %806 = vst [vmem:[#allocation2 + $0x10] sm:$0xff] %v802
        %807 = vst [vmem:[#allocation2 + $0x18] sm:$0xff] %v803
        %v808 = vld [vmem:[#allocation15 + $0x2] sm:$0x1]
        %v809 = vld [vmem:[#allocation15 + $0x3] sm:$0x1]
        %v810 = vmul.f32 %v716, %v478
        %811 = vadd.xlane.f32.xlu0 %v810
        %v812 = vpop.xlane.xlu0 %811
        %v813 = vmul.f32 %v812, 0.03125
        %v814 = vsub.f32 %v716, %v813
        %v815 = vmul.f32 %v814, %v478
        %v816 = vmul.f32 %v815, %v815
        %817 = vadd.xlane.f32.xlu0 %v816
        %v818 = vpop.xlane.xlu0 %817
        %v819 = vmul.f32 %v818, 0.03125
        %v820 = vadd.f32 %v819, 1e-05
        %v821 = vrsqrt.pop %v820
        %v822 = vmul.f32 %v815, %v821
        %v823 = vlaneseq
        %v824 = vshrl.u32 %v823, 7
        %v825 = vsub.s32 0, %v824
        %v826 = vrot.slane %v808, %v825
        %v827 = vmul.f32 %v822, %v826
        %v828 = vlaneseq
        %v829 = vshrl.u32 %v828, 7
        %v830 = vsub.s32 0, %v829
        %v831 = vrot.slane %v809, %v830
        %v832 = vadd.f32 %v827, %v831
        %v833 = vxor.u32 %v832, 2147483648
        %v834 = vmul.f32 %v833, 1.442695
        %v835 = vpow.pop %v834
        %v836 = vadd.f32 %v835, 1.0
        %v837 = vrcp.pop %v836
        %v838 = vmul.f32 1.0, %v837
        %v839 = vmul.f32 %v832, %v838
        %v840 = vadd.f32 %v479, %v839
        %841 = vst [vmem:[%s464] sm:$0xff] %v840
        %p842 = scmp.eq.s32.totalorder %s32, 2
        // Predicated region
        $region89: #{tpu_custom_call.1} parent=51 // pred_check
          %p843 = pneg %p842
        $region90: #{tpu_custom_call.1} parent=51 // pred_check_branch
          %845 = sbr.rel (%p843) target = $region92
        $region91: #{tpu_custom_call.1} parent=51 // pred_region
          %v846 = vld [vmem:[#allocation2] sm:$0xff]
          %v847 = vld [vmem:[#allocation2 + $0x10] sm:$0xff]
          %v848 = vld [vmem:[#allocation2 + $0x8] sm:$0xff]
          %v849 = vld [vmem:[#allocation2 + $0x18] sm:$0xff]
          %v850 = vadd.f32 %v848, 1e-06
          %v851 = vadd.f32 %v849, 1e-06
          %v852 = vrcp.pop %v850
          %v853 = vmul.f32 %v846, %v852
          %v854 = vrcp.pop %v851
          %v855 = vmul.f32 %v847, %v854
          %v856 = vld [vmem:[#allocation8] sm:$0xff]
          %v857 = vld [vmem:[#allocation8 + $0x8] sm:$0xff]
          %v858 = vadd.f32 %v856, %v853
          %v859 = vadd.f32 %v857, %v855
          %v860 = vld [vmem:[#allocation15] sm:$0x1]
          %v861 = vld [vmem:[#allocation15 + $0x1] sm:$0x1]
          %v862 = vmul.f32 %v858, %v478
          %v863 = vmul.f32 %v859, %v478
          %864 = vadd.xlane.f32.xlu0 %v862
          %v865 = vpop.xlane.xlu0 %864
          %866 = vadd.xlane.f32.xlu0 %v863
          %v867 = vpop.xlane.xlu0 %866
          %v868 = vmul.f32 %v865, 0.03125
          %v869 = vmul.f32 %v867, 0.03125
          %v870 = vsub.f32 %v858, %v868
          %v871 = vsub.f32 %v859, %v869
          %v872 = vmul.f32 %v870, %v478
          %v873 = vmul.f32 %v871, %v478
          %v874 = vmul.f32 %v872, %v872
          %v875 = vmul.f32 %v873, %v873
          %876 = vadd.xlane.f32.xlu0 %v874
          %v877 = vpop.xlane.xlu0 %876
          %878 = vadd.xlane.f32.xlu0 %v875
          %v879 = vpop.xlane.xlu0 %878
          %v880 = vmul.f32 %v877, 0.03125
          %v881 = vmul.f32 %v879, 0.03125
          %v882 = vadd.f32 %v880, 1e-05
          %v883 = vadd.f32 %v881, 1e-05
          %v884 = vrsqrt.pop %v882
          %v885 = vrsqrt.pop %v883
          %v886 = vmul.f32 %v872, %v884
          %v887 = vmul.f32 %v873, %v885
          %v888 = vlaneseq
          %v889 = vshrl.u32 %v888, 7
          %v890 = vsub.s32 0, %v889
          %v891 = vrot.slane %v860, %v890
          %v892 = vmul.f32 %v886, %v891
          %v893 = vmul.f32 %v887, %v891
          %v894 = vlaneseq
          %v895 = vshrl.u32 %v894, 7
          %v896 = vsub.s32 0, %v895
          %v897 = vrot.slane %v861, %v896
          %v898 = vadd.f32 %v892, %v897
          %v899 = vadd.f32 %v893, %v897
          %v900 = vxor.u32 %v898, 2147483648
          %v901 = vxor.u32 %v899, 2147483648
          %v902 = vmul.f32 %v900, 1.442695
          %v903 = vpow.pop %v902
          %v904 = vmul.f32 %v901, 1.442695
          %v905 = vpow.pop %v904
          %v906 = vadd.f32 %v903, 1.0
          %v907 = vadd.f32 %v905, 1.0
          %v908 = vrcp.pop %v906
          %v909 = vmul.f32 1.0, %v908
          %v910 = vrcp.pop %v907
          %v911 = vmul.f32 1.0, %v910
          %v912 = vmul.f32 %v898, %v909
          %v913 = vmul.f32 %v899, %v911
          %v914 = vld [vmem:[#allocation3] sm:$0xff]
          %v915 = vld [vmem:[#allocation3 + $0x8] sm:$0xff]
          %v916 = vadd.f32 %v914, %v912
          %v917 = vadd.f32 %v915, %v913
          %918 = vst [vmem:[#allocation17] sm:$0xff] %v916
          %919 = vst [vmem:[#allocation17 + $0x8] sm:$0xff] %v917
        $region92: #{tpu_custom_call.1} parent=51 // pred_fallthru
          _
        %s920 = sand.u32 %s239, 1
        %s921 = scalar_lea.sflag [#allocation19], %s920
        %s922 = sand.u32 %s239, 1
        %s923 = smul.addr %s922, 8
        %s924 = scalar_lea.vmem [#allocation18], %s923
        // Predicated region
        $region93: #{tpu_custom_call.1} parent=51 // pred_check
          %p925 = pneg %p223
        $region94: #{tpu_custom_call.1} parent=51 // pred_check_branch
          %927 = sbr.rel (%p925) target = $region96
        $region95: #{tpu_custom_call.1} parent=51 // pred_region
          %s929 = ssub.s32 256, 256
          %930 = vsyncadd [#allocation5], %s929
          %s931 = sshll.u32 [#allocation17], 4
          %s932 = int_to_ptr.vmem [resolvable:$true] %s931
          %937 = dma.vmem_to_hbm [thread:$0]  %s932, 256, %s8, [#allocation5], 128, 128, 8
        $region96: #{tpu_custom_call.1} parent=51 // pred_fallthru
          _
        // Predicated region
        $region97: #{tpu_custom_call.1} parent=51 // pred_check
          %p938 = pneg %p249
        $region98: #{tpu_custom_call.1} parent=51 // pred_check_branch
          %940 = sbr.rel (%p938) target = $region100
        $region99: #{tpu_custom_call.1} parent=51 // pred_region
          %s942 = ssub.s32 128, 128
          %943 = vsyncadd %s921, %s942
          %s944 = smul.addr %s32, 128
          %s945 = scalar_lea.hbm %s9, %s944
          %s947 = sshll.u32 %s924, 4
          %s948 = int_to_ptr.vmem [resolvable:$true] %s947
          %950 = dma.vmem_to_hbm [thread:$0]  %s948, 128, %s945, %s921
        $region100: #{tpu_custom_call.1} parent=51 // pred_fallthru
          _
        // Predicated region
        $region101: #{tpu_custom_call.1} parent=51 // pred_check
          %p951 = pneg %p223
        $region102: #{tpu_custom_call.1} parent=51 // pred_check_branch
          %953 = sbr.rel (%p951) target = $region104
        $region103: #{tpu_custom_call.1} parent=51 // pred_region
          %954 = dma.done [#allocation5], 256
        $region104: #{tpu_custom_call.1} parent=51 // pred_fallthru
          _
      $region52: #{tpu_custom_call.1} parent=5 // pred_fallthru
        _
      %p955 = scmp.le.s32.totalorder 2, %s27
      // Predicated region
      $region105: #{tpu_custom_call.1} parent=5 // pred_check
        %p956 = pneg %p955
      $region106: #{tpu_custom_call.1} parent=5 // pred_check_branch
        %958 = sbr.rel (%p956) target = $region108
      $region107: #{tpu_custom_call.1} parent=5 // pred_region
        %s959 = ssub.s32 %s27, 2
        // Predicated region
        $region109: #{tpu_custom_call.1} parent=107 // pred_check
          %p960 = pneg %p255
        $region110: #{tpu_custom_call.1} parent=107 // pred_check_branch
          %962 = sbr.rel (%p960) target = $region112
        $region111: #{tpu_custom_call.1} parent=107 // pred_region
          %s963 = sand.u32 %s240, 1
          %s964 = scalar_lea.sflag [#allocation19], %s963
          %s965 = sand.u32 %s240, 1
          %s966 = smul.addr %s965, 8
          %s967 = scalar_lea.vmem [#allocation18], %s966
          %968 = dma.done %s964, 128
        $region112: #{tpu_custom_call.1} parent=107 // pred_fallthru
          _
      $region108: #{tpu_custom_call.1} parent=5 // pred_fallthru
        _
    $region6: #{tpu_custom_call.1} parent=1 // loop_footer
      %s31 = sadd.s32 1, %s27
    $region7: #{tpu_custom_call.1} parent=1 // loop_footer_branch
      %26 = sbr.rel target = $region3
    $region8: #{tpu_custom_call.1} parent=1 // loop_exit
      _
    %969 = vsyncpa [#allocation4], 1
    %s970 = scalar_lea.sflag [#allocation4], 1
    %971 = vsyncpa %s970, 1
    %972 = vsyncpa [#allocation7], 1
    %973 = vsyncpa [#allocation10], 1
    %s974 = scalar_lea.sflag [#allocation10], 1
    %975 = vsyncpa %s974, 1
    %976 = vsyncpa [#allocation13], 1
    %977 = vsyncpa [#allocation16], 1
    %978 = vsyncpa [#allocation5], 1
    %s979 = scalar_lea.sflag [#allocation5], 1
    %980 = vsyncpa %s979, 1
    %981 = vsyncpa [#allocation19], 1
    %s982 = scalar_lea.sflag [#allocation19], 1
    %983 = vsyncpa %s982, 1

</llo_original>
